<compile_context>
chip_gen: v5e
topology: v5e:2x2
jax: 0.10.0
libtpu: 0.0.40
codegen_flags: <defaults>
</compile_context>

<pallas_src>
import functools

import jax
import jax.numpy as jnp
import numpy as np
from jax.experimental import pallas as pl
from jax.experimental.pallas import tpu as pltpu

NEG_INF = -1e30  # finite stand-in for -inf: padded logit columns vanish in the softmax


def char_rnn_kernel(x_ref, h0_ref, wih_ref, whh_ref, bx_ref, bhn_ref,
                    wdec_ref, bdec_ref, out_ref, hout_ref, seq_ref):
    """Single invocation (grid=(1,)): full GRU stack + decoder + log-softmax.

    x_ref    : (T*Bp, H)   bf16 time-major embedded input
    h0_ref   : (L, Bp, H)  f32 initial hidden state (aliased with hout_ref)
    wih/whh  : (L, H, 3H)  bf16 fused gate weights, column blocks [r | z | n]
    bx_ref   : (L, 1, 3H)  f32 fused bias: b_ih + [b_hh_r | b_hh_z | 0]
    bhn_ref  : (L, 1, H)   f32 hidden-side bias of the n gate
    wdec_ref : (H, Op)     bf16 decoder weight (lane-padded with zeros)
    bdec_ref : (1, Op)     f32 decoder bias (padded columns = -1e30)
    out_ref  : (T*Bp, Op)  f32 log-probs (time-major rows)
    hout_ref : (L, Bp, H)  f32 final hidden state
    seq_ref  : (T*Bp, H)   f32 VMEM scratch, per-layer output sequence
    """
    TB, H = x_ref.shape
    L, Bp, _ = h0_ref.shape
    T = TB // Bp
    H2 = 2 * H

    for l in range(L):                                 # static, small
        # [R5] layer input: embedded tokens for layer 0, previous layer's scratch after
        cur = x_ref[...] if l == 0 else seq_ref[...].astype(jnp.bfloat16)
        # batched input-side projection for all timesteps at once -> (T*Bp, 3H) f32
        gi_all = jnp.dot(cur, wih_ref[l],
                         preferred_element_type=jnp.float32) + bx_ref[l]
        whh_l = whh_ref[l]                             # (H, 3H) bf16, loaded once/layer
        bhn_l = bhn_ref[l]                             # (1, H) f32
        h = h0_ref[l]                                  # (Bp, H) f32
        for t in range(T):                             # serial recurrence, static offsets
            gi = gi_all[t * Bp:(t + 1) * Bp, :]        # (Bp, 3H)
            # [R6] bf16 only at the MXU boundary; state/gate math stay f32
            gh = jnp.dot(h.astype(jnp.bfloat16), whh_l,
                         preferred_element_type=jnp.float32)       # (Bp, 3H), no bias
            # [R3]/[R4] single sigmoid over fused [r|z]; hidden r/z bias already in gi
            rz = jax.nn.sigmoid(gi[:, :H2] + gh[:, :H2])
            r = rz[:, :H]
            z = rz[:, H:]
            n = jnp.tanh(gi[:, H2:] + r * (gh[:, H2:] + bhn_l))
            h = n + z * (h - n)                        # == (1 - z) * n + z * h
            seq_ref[t * Bp:(t + 1) * Bp, :] = h        # [R5] static-offset scratch write
        hout_ref[l] = h
        # TODO(synk): nn.GRU dropout=0.3 between layers is training-only; eval semantics here.

    # batched decoder + log-softmax over every timestep at once (lane-dense store)
    logits = jnp.dot(seq_ref[...].astype(jnp.bfloat16), wdec_ref[...],
                     preferred_element_type=jnp.float32) + bdec_ref[...]
    m = jnp.max(logits, axis=-1, keepdims=True)
    lse = jnp.log(jnp.sum(jnp.exp(logits - m), axis=-1, keepdims=True))
    out_ref[...] = logits - m - lse


def pack_params(params):
    """One-time packing: fuse biases, lane-pad the decoder, cast MXU weights to bf16. [R4][R6][R8]"""
    emb, wih, whh, bih, bhh, wdec, bdec = (params[k] for k in
                                           ("emb", "wih", "whh", "bih", "bhh", "wdec", "bdec"))
    H = wih.shape[1]
    O = wdec.shape[1]
    Op = ((O + 127) // 128) * 128
    bx = bih.at[:, :, :2 * H].add(bhh[:, :, :2 * H]).astype(jnp.float32)   # (L,1,3H)
    bhn = bhh[:, :, 2 * H:].astype(jnp.float32)                            # (L,1,H)
    wdec_p = jnp.pad(wdec, ((0, 0), (0, Op - O))).astype(jnp.bfloat16)
    bdec_p = jnp.pad(bdec, ((0, 0), (0, Op - O)),
                     constant_values=NEG_INF).astype(jnp.float32)
    return dict(emb=emb.astype(jnp.bfloat16),
                wih=wih.astype(jnp.bfloat16),
                whh=whh.astype(jnp.bfloat16),
                bx=bx, bhn=bhn, wdec=wdec_p, bdec=bdec_p)


@functools.partial(jax.jit, static_argnames=("out_size",))
def char_rnn_forward(x_ids, hidden, packed, *, out_size):
    """x_ids: (B, T) int32, hidden: (L, B, H) f32 -> (log_probs (B*T, O), hidden (L, B, H))."""
    B, T = x_ids.shape
    L, _, H = hidden.shape
    Op = packed["wdec"].shape[1]
    Bp = ((B + 7) // 8) * 8                      # sublane-pad the batch
    pad_id = packed["emb"].shape[0] - 1          # padding_idx = output_size (zero row)

    # [R8] pad the (cheap) int ids, gather straight into a time-major bf16 slab
    x_ids_p = jnp.pad(x_ids, ((0, Bp - B), (0, 0)), constant_values=pad_id)
    x_flat = packed["emb"][x_ids_p.T].reshape(T * Bp, H)                 # (T*Bp, H) bf16
    h0 = jnp.pad(hidden.astype(jnp.float32), ((0, 0), (0, Bp - B), (0, 0)))

    out_pad, h_out = pl.pallas_call(
        char_rnn_kernel,
        out_shape=(jax.ShapeDtypeStruct((T * Bp, Op), jnp.float32),
                   jax.ShapeDtypeStruct((L, Bp, H), jnp.float32)),
        grid_spec=pltpu.PrefetchScalarGridSpec(
            num_scalar_prefetch=0,
            grid=(1,),
            in_specs=[
                pl.BlockSpec((T * Bp, H), lambda i: (0, 0)),           # x_emb (time-major)
                pl.BlockSpec((L, Bp, H), lambda i: (0, 0, 0)),         # h0 (aliased)
                pl.BlockSpec((L, H, 3 * H), lambda i: (0, 0, 0)),      # fused w_ih (bf16)
                pl.BlockSpec((L, H, 3 * H), lambda i: (0, 0, 0)),      # fused w_hh (bf16)
                pl.BlockSpec((L, 1, 3 * H), lambda i: (0, 0, 0)),      # fused bias bx
                pl.BlockSpec((L, 1, H), lambda i: (0, 0, 0)),          # n-gate hidden bias
                pl.BlockSpec((H, Op), lambda i: (0, 0)),               # decoder weight (padded)
                pl.BlockSpec((1, Op), lambda i: (0, 0)),               # decoder bias (padded)
            ],
            out_specs=[
                pl.BlockSpec((T * Bp, Op), lambda i: (0, 0)),          # all-step log-probs
                pl.BlockSpec((L, Bp, H), lambda i: (0, 0, 0)),         # final hidden
            ],
            scratch_shapes=[pltpu.VMEM((T * Bp, H), jnp.float32)],     # [R5] layer-output seq
        ),
        input_output_aliases={1: 1},                                   # [R7] h0 <-> hout
        compiler_params=pltpu.CompilerParams(
            dimension_semantics=("arbitrary",),
            vmem_limit_bytes=32 * 1024 * 1024),                        # [R9]
    )(x_flat, h0, packed["wih"], packed["whh"], packed["bx"], packed["bhn"],
      packed["wdec"], packed["bdec"])

    # (T, Bp, Op) -> drop padding -> (B, T, O) -> (B*T, O), matching batch_first + view
    out = out_pad.reshape(T, Bp, Op)[:, :B, :out_size]
    out = jnp.transpose(out, (1, 0, 2)).reshape(B * T, out_size)
    return out, h_out[:, :B, :]


def ref_forward(x_ids, hidden, params):
    """Pure-JAX reference mirroring the kernel's packing and bf16 matmul boundaries."""
    emb = params["emb"].astype(jnp.bfloat16)
    wih = params["wih"].astype(jnp.bfloat16)
    whh = params["whh"].astype(jnp.bfloat16)
    wdec = params["wdec"].astype(jnp.bfloat16)
    bdec = params["bdec"]
    H = hidden.shape[2]
    L = hidden.shape[0]
    bx = params["bih"].at[:, :, :2 * H].add(params["bhh"][:, :, :2 * H])
    bhn = params["bhh"][:, :, 2 * H:]

    x = emb[x_ids]                     # (B, T, H) bf16
    B, T = x_ids.shape
    hs = [hidden[l].astype(jnp.float32) for l in range(L)]
    outs = []
    for t in range(T):
        x_cur = x[:, t]
        for l in range(L):
            h_prev = hs[l]
            gi = jnp.dot(x_cur, wih[l], preferred_element_type=jnp.float32) + bx[l]
            gh = jnp.dot(h_prev.astype(jnp.bfloat16), whh[l],
                         preferred_element_type=jnp.float32)
            rz = jax.nn.sigmoid(gi[:, :2 * H] + gh[:, :2 * H])
            r, z = rz[:, :H], rz[:, H:]
            n = jnp.tanh(gi[:, 2 * H:] + r * (gh[:, 2 * H:] + bhn[l]))
            h_new = n + z * (h_prev - n)
            hs[l] = h_new
            x_cur = h_new.astype(jnp.bfloat16)
        logits = jnp.dot(x_cur, wdec, preferred_element_type=jnp.float32) + bdec
        outs.append(jax.nn.log_softmax(logits, axis=-1))
    output = jnp.stack(outs, axis=1).reshape(B * T, -1)
    return output, jnp.stack(hs)


def init_params(key, output_size, hidden_size, num_layers):
    H, O, L = hidden_size, output_size, num_layers
    ks = jax.random.split(key, 7)
    scale = 0.1
    emb = scale * jax.random.normal(ks[0], (O + 1, H), jnp.float32)
    emb = emb.at[O].set(0.0)  # padding_idx = output_size
    wih = scale * jax.random.normal(ks[1], (L, H, 3 * H), jnp.float32)
    whh = scale * jax.random.normal(ks[2], (L, H, 3 * H), jnp.float32)
    bih = scale * jax.random.normal(ks[3], (L, 1, 3 * H), jnp.float32)
    bhh = scale * jax.random.normal(ks[4], (L, 1, 3 * H), jnp.float32)
    wdec = scale * jax.random.normal(ks[5], (H, O), jnp.float32)
    bdec = scale * jax.random.normal(ks[6], (1, O), jnp.float32)
    return dict(emb=emb, wih=wih, whh=whh, bih=bih, bhh=bhh, wdec=wdec, bdec=bdec)


if __name__ == "__main__":
    output_size, hidden_size, num_layers = 64, 32, 2
    B, T = 4, 8

    key = jax.random.PRNGKey(0)
    kp, kx = jax.random.split(key)
    params = init_params(kp, output_size, hidden_size, num_layers)
    packed = pack_params(params)

    x_ids = jax.random.randint(kx, (B, T), 0, output_size, dtype=jnp.int32)
    hidden0 = jnp.zeros((num_layers, B, hidden_size), jnp.float32)  # init_hidden

    out, h_out = char_rnn_forward(x_ids, hidden0, packed, out_size=output_size)
    out, h_out = jax.block_until_ready((out, h_out))

    ref_out, ref_h = ref_forward(x_ids, hidden0, params)
    assert out.shape == (B * T, output_size) and h_out.shape == (num_layers, B, hidden_size)
    np.testing.assert_allclose(np.asarray(out), np.asarray(ref_out), atol=1e-4, rtol=1e-4)
    np.testing.assert_allclose(np.asarray(h_out), np.asarray(ref_h), atol=1e-4, rtol=1e-4)

    print("KERNEL_OK")
</pallas_src>

<mosaic_0001>
module attributes {stable_mosaic.version = 11 : i64} {
  func.func @char_rnn_kernel(%arg0: i32, %arg1: memref<64x32xbf16, #tpu.memory_space<vmem>>, %arg2: memref<2x8x32xf32, #tpu.memory_space<vmem>>, %arg3: memref<2x32x96xbf16, #tpu.memory_space<vmem>>, %arg4: memref<2x32x96xbf16, #tpu.memory_space<vmem>>, %arg5: memref<2x1x96xf32, #tpu.memory_space<vmem>>, %arg6: memref<2x1x32xf32, #tpu.memory_space<vmem>>, %arg7: memref<32x128xbf16, #tpu.memory_space<vmem>>, %arg8: memref<1x128xf32, #tpu.memory_space<vmem>>, %arg9: memref<64x128xf32, #tpu.memory_space<vmem>>, %arg10: memref<2x8x32xf32, #tpu.memory_space<vmem>>, %arg11: memref<64x32xf32, #tpu.memory_space<vmem>>) attributes {dimension_semantics = [#tpu.dimension_semantics<arbitrary>], iteration_bounds = array<i64: 1>, scalar_prefetch = 0 : i64, scratch_operands = 1 : i64, tpu.core_type = #tpu.core_type<tc>, window_params = [{pipeline_mode = #tpu.pipeline_mode<synchronous>, transform_indices = @transform_0, window_bounds = array<i64: 64, 32>}, {pipeline_mode = #tpu.pipeline_mode<synchronous>, transform_indices = @transform_1, window_bounds = array<i64: 2, 8, 32>}, {pipeline_mode = #tpu.pipeline_mode<synchronous>, transform_indices = @transform_2, window_bounds = array<i64: 2, 32, 96>}, {pipeline_mode = #tpu.pipeline_mode<synchronous>, transform_indices = @transform_3, window_bounds = array<i64: 2, 32, 96>}, {pipeline_mode = #tpu.pipeline_mode<synchronous>, transform_indices = @transform_4, window_bounds = array<i64: 2, 1, 96>}, {pipeline_mode = #tpu.pipeline_mode<synchronous>, transform_indices = @transform_5, window_bounds = array<i64: 2, 1, 32>}, {pipeline_mode = #tpu.pipeline_mode<synchronous>, transform_indices = @transform_6, window_bounds = array<i64: 32, 128>}, {pipeline_mode = #tpu.pipeline_mode<synchronous>, transform_indices = @transform_7, window_bounds = array<i64: 1, 128>}, {pipeline_mode = #tpu.pipeline_mode<synchronous>, transform_indices = @transform_8, window_bounds = array<i64: 64, 128>}, {pipeline_mode = #tpu.pipeline_mode<synchronous>, transform_indices = @transform_9, window_bounds = array<i64: 2, 8, 32>}]} {
    %c0 = arith.constant 0 : index
    %c0_0 = arith.constant 0 : index
    %0 = vector.load %arg1[%c0, %c0_0] : memref<64x32xbf16, #tpu.memory_space<vmem>>, vector<64x32xbf16>
    %c0_1 = arith.constant 0 : index
    %c0_2 = arith.constant 0 : index
    %c0_3 = arith.constant 0 : index
    %1 = vector.load %arg3[%c0_1, %c0_2, %c0_3] : memref<2x32x96xbf16, #tpu.memory_space<vmem>>, vector<1x32x96xbf16>
    %2 = vector.shape_cast %1 : vector<1x32x96xbf16> to vector<32x96xbf16>
    %cst = arith.constant dense<0.000000e+00> : vector<64x96xf32>
    %3 = tpu.matmul %0, %2, %cst {dimension_numbers = #tpu.dot_dimension_numbers<[1], [0], [0], [1], [0, 0, 1, 1], [], []>} : vector<64x32xbf16>, vector<32x96xbf16>, vector<64x96xf32> -> vector<64x96xf32>
    %c0_4 = arith.constant 0 : index
    %c0_5 = arith.constant 0 : index
    %c0_6 = arith.constant 0 : index
    %4 = vector.load %arg5[%c0_4, %c0_5, %c0_6] : memref<2x1x96xf32, #tpu.memory_space<vmem>>, vector<1x1x96xf32>
    %5 = vector.shape_cast %4 : vector<1x1x96xf32> to vector<1x96xf32>
    %6 = vector.broadcast %5 : vector<1x96xf32> to vector<64x96xf32>
    %7 = arith.addf %3, %6 : vector<64x96xf32>
    %c0_7 = arith.constant 0 : index
    %c0_8 = arith.constant 0 : index
    %c0_9 = arith.constant 0 : index
    %8 = vector.load %arg4[%c0_7, %c0_8, %c0_9] : memref<2x32x96xbf16, #tpu.memory_space<vmem>>, vector<1x32x96xbf16>
    %9 = vector.shape_cast %8 : vector<1x32x96xbf16> to vector<32x96xbf16>
    %c0_10 = arith.constant 0 : index
    %c0_11 = arith.constant 0 : index
    %c0_12 = arith.constant 0 : index
    %10 = vector.load %arg6[%c0_10, %c0_11, %c0_12] : memref<2x1x32xf32, #tpu.memory_space<vmem>>, vector<1x1x32xf32>
    %11 = vector.shape_cast %10 : vector<1x1x32xf32> to vector<1x32xf32>
    %c0_13 = arith.constant 0 : index
    %c0_14 = arith.constant 0 : index
    %c0_15 = arith.constant 0 : index
    %12 = vector.load %arg2[%c0_13, %c0_14, %c0_15] : memref<2x8x32xf32, #tpu.memory_space<vmem>>, vector<1x8x32xf32>
    %13 = vector.shape_cast %12 : vector<1x8x32xf32> to vector<8x32xf32>
    %14 = vector.extract_strided_slice %7 {offsets = [0, 0], sizes = [8, 96], strides = [1, 1]} : vector<64x96xf32> to vector<8x96xf32>
    %15 = arith.truncf %13 : vector<8x32xf32> to vector<8x32xbf16>
    %cst_16 = arith.constant dense<0.000000e+00> : vector<8x96xf32>
    %16 = tpu.matmul %15, %9, %cst_16 {dimension_numbers = #tpu.dot_dimension_numbers<[1], [0], [0], [1], [0, 0, 1, 1], [], []>} : vector<8x32xbf16>, vector<32x96xbf16>, vector<8x96xf32> -> vector<8x96xf32>
    %17 = vector.extract_strided_slice %14 {offsets = [0, 0], sizes = [8, 64], strides = [1, 1]} : vector<8x96xf32> to vector<8x64xf32>
    %18 = vector.extract_strided_slice %16 {offsets = [0, 0], sizes = [8, 64], strides = [1, 1]} : vector<8x96xf32> to vector<8x64xf32>
    %19 = arith.addf %17, %18 : vector<8x64xf32>
    %20 = arith.negf %19 : vector<8x64xf32>
    %21 = math.exp %20 : vector<8x64xf32>
    %cst_17 = arith.constant 1.000000e+00 : f32
    %22 = vector.broadcast %cst_17 : f32 to vector<8x64xf32>
    %23 = arith.addf %22, %21 : vector<8x64xf32>
    %24 = arith.divf %22, %23 : vector<8x64xf32>
    %25 = vector.extract_strided_slice %24 {offsets = [0, 0], sizes = [8, 32], strides = [1, 1]} : vector<8x64xf32> to vector<8x32xf32>
    %26 = vector.extract_strided_slice %24 {offsets = [0, 32], sizes = [8, 32], strides = [1, 1]} : vector<8x64xf32> to vector<8x32xf32>
    %27 = vector.extract_strided_slice %14 {offsets = [0, 64], sizes = [8, 32], strides = [1, 1]} : vector<8x96xf32> to vector<8x32xf32>
    %28 = vector.extract_strided_slice %16 {offsets = [0, 64], sizes = [8, 32], strides = [1, 1]} : vector<8x96xf32> to vector<8x32xf32>
    %29 = vector.broadcast %11 : vector<1x32xf32> to vector<8x32xf32>
    %30 = arith.addf %28, %29 : vector<8x32xf32>
    %31 = arith.mulf %25, %30 : vector<8x32xf32>
    %32 = arith.addf %27, %31 : vector<8x32xf32>
    %33 = math.tanh %32 : vector<8x32xf32>
    %34 = arith.subf %13, %33 : vector<8x32xf32>
    %35 = arith.mulf %26, %34 : vector<8x32xf32>
    %36 = arith.addf %33, %35 : vector<8x32xf32>
    %c0_18 = arith.constant 0 : index
    %c0_19 = arith.constant 0 : index
    %37 = vector.load %arg11[%c0_18, %c0_19] : memref<64x32xf32, #tpu.memory_space<vmem>>, vector<8x32xf32>
    tpu.vector_store %arg11[%c0_18, %c0_19], %36 {strides = array<i32>} : memref<64x32xf32, #tpu.memory_space<vmem>>, vector<8x32xf32>,
    %38 = vector.extract_strided_slice %7 {offsets = [8, 0], sizes = [8, 96], strides = [1, 1]} : vector<64x96xf32> to vector<8x96xf32>
    %39 = arith.truncf %36 : vector<8x32xf32> to vector<8x32xbf16>
    %cst_20 = arith.constant dense<0.000000e+00> : vector<8x96xf32>
    %40 = tpu.matmul %39, %9, %cst_20 {dimension_numbers = #tpu.dot_dimension_numbers<[1], [0], [0], [1], [0, 0, 1, 1], [], []>} : vector<8x32xbf16>, vector<32x96xbf16>, vector<8x96xf32> -> vector<8x96xf32>
    %41 = vector.extract_strided_slice %38 {offsets = [0, 0], sizes = [8, 64], strides = [1, 1]} : vector<8x96xf32> to vector<8x64xf32>
    %42 = vector.extract_strided_slice %40 {offsets = [0, 0], sizes = [8, 64], strides = [1, 1]} : vector<8x96xf32> to vector<8x64xf32>
    %43 = arith.addf %41, %42 : vector<8x64xf32>
    %44 = arith.negf %43 : vector<8x64xf32>
    %45 = math.exp %44 : vector<8x64xf32>
    %cst_21 = arith.constant 1.000000e+00 : f32
    %46 = vector.broadcast %cst_21 : f32 to vector<8x64xf32>
    %47 = arith.addf %46, %45 : vector<8x64xf32>
    %48 = arith.divf %46, %47 : vector<8x64xf32>
    %49 = vector.extract_strided_slice %48 {offsets = [0, 0], sizes = [8, 32], strides = [1, 1]} : vector<8x64xf32> to vector<8x32xf32>
    %50 = vector.extract_strided_slice %48 {offsets = [0, 32], sizes = [8, 32], strides = [1, 1]} : vector<8x64xf32> to vector<8x32xf32>
    %51 = vector.extract_strided_slice %38 {offsets = [0, 64], sizes = [8, 32], strides = [1, 1]} : vector<8x96xf32> to vector<8x32xf32>
    %52 = vector.extract_strided_slice %40 {offsets = [0, 64], sizes = [8, 32], strides = [1, 1]} : vector<8x96xf32> to vector<8x32xf32>
    %53 = vector.broadcast %11 : vector<1x32xf32> to vector<8x32xf32>
    %54 = arith.addf %52, %53 : vector<8x32xf32>
    %55 = arith.mulf %49, %54 : vector<8x32xf32>
    %56 = arith.addf %51, %55 : vector<8x32xf32>
    %57 = math.tanh %56 : vector<8x32xf32>
    %58 = arith.subf %36, %57 : vector<8x32xf32>
    %59 = arith.mulf %50, %58 : vector<8x32xf32>
    %60 = arith.addf %57, %59 : vector<8x32xf32>
    %c8 = arith.constant 8 : index
    %c0_22 = arith.constant 0 : index
    %61 = vector.load %arg11[%c8, %c0_22] : memref<64x32xf32, #tpu.memory_space<vmem>>, vector<8x32xf32>
    tpu.vector_store %arg11[%c8, %c0_22], %60 {strides = array<i32>} : memref<64x32xf32, #tpu.memory_space<vmem>>, vector<8x32xf32>,
    %62 = vector.extract_strided_slice %7 {offsets = [16, 0], sizes = [8, 96], strides = [1, 1]} : vector<64x96xf32> to vector<8x96xf32>
    %63 = arith.truncf %60 : vector<8x32xf32> to vector<8x32xbf16>
    %cst_23 = arith.constant dense<0.000000e+00> : vector<8x96xf32>
    %64 = tpu.matmul %63, %9, %cst_23 {dimension_numbers = #tpu.dot_dimension_numbers<[1], [0], [0], [1], [0, 0, 1, 1], [], []>} : vector<8x32xbf16>, vector<32x96xbf16>, vector<8x96xf32> -> vector<8x96xf32>
    %65 = vector.extract_strided_slice %62 {offsets = [0, 0], sizes = [8, 64], strides = [1, 1]} : vector<8x96xf32> to vector<8x64xf32>
    %66 = vector.extract_strided_slice %64 {offsets = [0, 0], sizes = [8, 64], strides = [1, 1]} : vector<8x96xf32> to vector<8x64xf32>
    %67 = arith.addf %65, %66 : vector<8x64xf32>
    %68 = arith.negf %67 : vector<8x64xf32>
    %69 = math.exp %68 : vector<8x64xf32>
    %cst_24 = arith.constant 1.000000e+00 : f32
    %70 = vector.broadcast %cst_24 : f32 to vector<8x64xf32>
    %71 = arith.addf %70, %69 : vector<8x64xf32>
    %72 = arith.divf %70, %71 : vector<8x64xf32>
    %73 = vector.extract_strided_slice %72 {offsets = [0, 0], sizes = [8, 32], strides = [1, 1]} : vector<8x64xf32> to vector<8x32xf32>
    %74 = vector.extract_strided_slice %72 {offsets = [0, 32], sizes = [8, 32], strides = [1, 1]} : vector<8x64xf32> to vector<8x32xf32>
    %75 = vector.extract_strided_slice %62 {offsets = [0, 64], sizes = [8, 32], strides = [1, 1]} : vector<8x96xf32> to vector<8x32xf32>
    %76 = vector.extract_strided_slice %64 {offsets = [0, 64], sizes = [8, 32], strides = [1, 1]} : vector<8x96xf32> to vector<8x32xf32>
    %77 = vector.broadcast %11 : vector<1x32xf32> to vector<8x32xf32>
    %78 = arith.addf %76, %77 : vector<8x32xf32>
    %79 = arith.mulf %73, %78 : vector<8x32xf32>
    %80 = arith.addf %75, %79 : vector<8x32xf32>
    %81 = math.tanh %80 : vector<8x32xf32>
    %82 = arith.subf %60, %81 : vector<8x32xf32>
    %83 = arith.mulf %74, %82 : vector<8x32xf32>
    %84 = arith.addf %81, %83 : vector<8x32xf32>
    %c16 = arith.constant 16 : index
    %c0_25 = arith.constant 0 : index
    %85 = vector.load %arg11[%c16, %c0_25] : memref<64x32xf32, #tpu.memory_space<vmem>>, vector<8x32xf32>
    tpu.vector_store %arg11[%c16, %c0_25], %84 {strides = array<i32>} : memref<64x32xf32, #tpu.memory_space<vmem>>, vector<8x32xf32>,
    %86 = vector.extract_strided_slice %7 {offsets = [24, 0], sizes = [8, 96], strides = [1, 1]} : vector<64x96xf32> to vector<8x96xf32>
    %87 = arith.truncf %84 : vector<8x32xf32> to vector<8x32xbf16>
    %cst_26 = arith.constant dense<0.000000e+00> : vector<8x96xf32>
    %88 = tpu.matmul %87, %9, %cst_26 {dimension_numbers = #tpu.dot_dimension_numbers<[1], [0], [0], [1], [0, 0, 1, 1], [], []>} : vector<8x32xbf16>, vector<32x96xbf16>, vector<8x96xf32> -> vector<8x96xf32>
    %89 = vector.extract_strided_slice %86 {offsets = [0, 0], sizes = [8, 64], strides = [1, 1]} : vector<8x96xf32> to vector<8x64xf32>
    %90 = vector.extract_strided_slice %88 {offsets = [0, 0], sizes = [8, 64], strides = [1, 1]} : vector<8x96xf32> to vector<8x64xf32>
    %91 = arith.addf %89, %90 : vector<8x64xf32>
    %92 = arith.negf %91 : vector<8x64xf32>
    %93 = math.exp %92 : vector<8x64xf32>
    %cst_27 = arith.constant 1.000000e+00 : f32
    %94 = vector.broadcast %cst_27 : f32 to vector<8x64xf32>
    %95 = arith.addf %94, %93 : vector<8x64xf32>
    %96 = arith.divf %94, %95 : vector<8x64xf32>
    %97 = vector.extract_strided_slice %96 {offsets = [0, 0], sizes = [8, 32], strides = [1, 1]} : vector<8x64xf32> to vector<8x32xf32>
    %98 = vector.extract_strided_slice %96 {offsets = [0, 32], sizes = [8, 32], strides = [1, 1]} : vector<8x64xf32> to vector<8x32xf32>
    %99 = vector.extract_strided_slice %86 {offsets = [0, 64], sizes = [8, 32], strides = [1, 1]} : vector<8x96xf32> to vector<8x32xf32>
    %100 = vector.extract_strided_slice %88 {offsets = [0, 64], sizes = [8, 32], strides = [1, 1]} : vector<8x96xf32> to vector<8x32xf32>
    %101 = vector.broadcast %11 : vector<1x32xf32> to vector<8x32xf32>
    %102 = arith.addf %100, %101 : vector<8x32xf32>
    %103 = arith.mulf %97, %102 : vector<8x32xf32>
    %104 = arith.addf %99, %103 : vector<8x32xf32>
    %105 = math.tanh %104 : vector<8x32xf32>
    %106 = arith.subf %84, %105 : vector<8x32xf32>
    %107 = arith.mulf %98, %106 : vector<8x32xf32>
    %108 = arith.addf %105, %107 : vector<8x32xf32>
    %c24 = arith.constant 24 : index
    %c0_28 = arith.constant 0 : index
    %109 = vector.load %arg11[%c24, %c0_28] : memref<64x32xf32, #tpu.memory_space<vmem>>, vector<8x32xf32>
    tpu.vector_store %arg11[%c24, %c0_28], %108 {strides = array<i32>} : memref<64x32xf32, #tpu.memory_space<vmem>>, vector<8x32xf32>,
    %110 = vector.extract_strided_slice %7 {offsets = [32, 0], sizes = [8, 96], strides = [1, 1]} : vector<64x96xf32> to vector<8x96xf32>
    %111 = arith.truncf %108 : vector<8x32xf32> to vector<8x32xbf16>
    %cst_29 = arith.constant dense<0.000000e+00> : vector<8x96xf32>
    %112 = tpu.matmul %111, %9, %cst_29 {dimension_numbers = #tpu.dot_dimension_numbers<[1], [0], [0], [1], [0, 0, 1, 1], [], []>} : vector<8x32xbf16>, vector<32x96xbf16>, vector<8x96xf32> -> vector<8x96xf32>
    %113 = vector.extract_strided_slice %110 {offsets = [0, 0], sizes = [8, 64], strides = [1, 1]} : vector<8x96xf32> to vector<8x64xf32>
    %114 = vector.extract_strided_slice %112 {offsets = [0, 0], sizes = [8, 64], strides = [1, 1]} : vector<8x96xf32> to vector<8x64xf32>
    %115 = arith.addf %113, %114 : vector<8x64xf32>
    %116 = arith.negf %115 : vector<8x64xf32>
    %117 = math.exp %116 : vector<8x64xf32>
    %cst_30 = arith.constant 1.000000e+00 : f32
    %118 = vector.broadcast %cst_30 : f32 to vector<8x64xf32>
    %119 = arith.addf %118, %117 : vector<8x64xf32>
    %120 = arith.divf %118, %119 : vector<8x64xf32>
    %121 = vector.extract_strided_slice %120 {offsets = [0, 0], sizes = [8, 32], strides = [1, 1]} : vector<8x64xf32> to vector<8x32xf32>
    %122 = vector.extract_strided_slice %120 {offsets = [0, 32], sizes = [8, 32], strides = [1, 1]} : vector<8x64xf32> to vector<8x32xf32>
    %123 = vector.extract_strided_slice %110 {offsets = [0, 64], sizes = [8, 32], strides = [1, 1]} : vector<8x96xf32> to vector<8x32xf32>
    %124 = vector.extract_strided_slice %112 {offsets = [0, 64], sizes = [8, 32], strides = [1, 1]} : vector<8x96xf32> to vector<8x32xf32>
    %125 = vector.broadcast %11 : vector<1x32xf32> to vector<8x32xf32>
    %126 = arith.addf %124, %125 : vector<8x32xf32>
    %127 = arith.mulf %121, %126 : vector<8x32xf32>
    %128 = arith.addf %123, %127 : vector<8x32xf32>
    %129 = math.tanh %128 : vector<8x32xf32>
    %130 = arith.subf %108, %129 : vector<8x32xf32>
    %131 = arith.mulf %122, %130 : vector<8x32xf32>
    %132 = arith.addf %129, %131 : vector<8x32xf32>
    %c32 = arith.constant 32 : index
    %c0_31 = arith.constant 0 : index
    %133 = vector.load %arg11[%c32, %c0_31] : memref<64x32xf32, #tpu.memory_space<vmem>>, vector<8x32xf32>
    tpu.vector_store %arg11[%c32, %c0_31], %132 {strides = array<i32>} : memref<64x32xf32, #tpu.memory_space<vmem>>, vector<8x32xf32>,
    %134 = vector.extract_strided_slice %7 {offsets = [40, 0], sizes = [8, 96], strides = [1, 1]} : vector<64x96xf32> to vector<8x96xf32>
    %135 = arith.truncf %132 : vector<8x32xf32> to vector<8x32xbf16>
    %cst_32 = arith.constant dense<0.000000e+00> : vector<8x96xf32>
    %136 = tpu.matmul %135, %9, %cst_32 {dimension_numbers = #tpu.dot_dimension_numbers<[1], [0], [0], [1], [0, 0, 1, 1], [], []>} : vector<8x32xbf16>, vector<32x96xbf16>, vector<8x96xf32> -> vector<8x96xf32>
    %137 = vector.extract_strided_slice %134 {offsets = [0, 0], sizes = [8, 64], strides = [1, 1]} : vector<8x96xf32> to vector<8x64xf32>
    %138 = vector.extract_strided_slice %136 {offsets = [0, 0], sizes = [8, 64], strides = [1, 1]} : vector<8x96xf32> to vector<8x64xf32>
    %139 = arith.addf %137, %138 : vector<8x64xf32>
    %140 = arith.negf %139 : vector<8x64xf32>
    %141 = math.exp %140 : vector<8x64xf32>
    %cst_33 = arith.constant 1.000000e+00 : f32
    %142 = vector.broadcast %cst_33 : f32 to vector<8x64xf32>
    %143 = arith.addf %142, %141 : vector<8x64xf32>
    %144 = arith.divf %142, %143 : vector<8x64xf32>
    %145 = vector.extract_strided_slice %144 {offsets = [0, 0], sizes = [8, 32], strides = [1, 1]} : vector<8x64xf32> to vector<8x32xf32>
    %146 = vector.extract_strided_slice %144 {offsets = [0, 32], sizes = [8, 32], strides = [1, 1]} : vector<8x64xf32> to vector<8x32xf32>
    %147 = vector.extract_strided_slice %134 {offsets = [0, 64], sizes = [8, 32], strides = [1, 1]} : vector<8x96xf32> to vector<8x32xf32>
    %148 = vector.extract_strided_slice %136 {offsets = [0, 64], sizes = [8, 32], strides = [1, 1]} : vector<8x96xf32> to vector<8x32xf32>
    %149 = vector.broadcast %11 : vector<1x32xf32> to vector<8x32xf32>
    %150 = arith.addf %148, %149 : vector<8x32xf32>
    %151 = arith.mulf %145, %150 : vector<8x32xf32>
    %152 = arith.addf %147, %151 : vector<8x32xf32>
    %153 = math.tanh %152 : vector<8x32xf32>
    %154 = arith.subf %132, %153 : vector<8x32xf32>
    %155 = arith.mulf %146, %154 : vector<8x32xf32>
    %156 = arith.addf %153, %155 : vector<8x32xf32>
    %c40 = arith.constant 40 : index
    %c0_34 = arith.constant 0 : index
    %157 = vector.load %arg11[%c40, %c0_34] : memref<64x32xf32, #tpu.memory_space<vmem>>, vector<8x32xf32>
    tpu.vector_store %arg11[%c40, %c0_34], %156 {strides = array<i32>} : memref<64x32xf32, #tpu.memory_space<vmem>>, vector<8x32xf32>,
    %158 = vector.extract_strided_slice %7 {offsets = [48, 0], sizes = [8, 96], strides = [1, 1]} : vector<64x96xf32> to vector<8x96xf32>
    %159 = arith.truncf %156 : vector<8x32xf32> to vector<8x32xbf16>
    %cst_35 = arith.constant dense<0.000000e+00> : vector<8x96xf32>
    %160 = tpu.matmul %159, %9, %cst_35 {dimension_numbers = #tpu.dot_dimension_numbers<[1], [0], [0], [1], [0, 0, 1, 1], [], []>} : vector<8x32xbf16>, vector<32x96xbf16>, vector<8x96xf32> -> vector<8x96xf32>
    %161 = vector.extract_strided_slice %158 {offsets = [0, 0], sizes = [8, 64], strides = [1, 1]} : vector<8x96xf32> to vector<8x64xf32>
    %162 = vector.extract_strided_slice %160 {offsets = [0, 0], sizes = [8, 64], strides = [1, 1]} : vector<8x96xf32> to vector<8x64xf32>
    %163 = arith.addf %161, %162 : vector<8x64xf32>
    %164 = arith.negf %163 : vector<8x64xf32>
    %165 = math.exp %164 : vector<8x64xf32>
    %cst_36 = arith.constant 1.000000e+00 : f32
    %166 = vector.broadcast %cst_36 : f32 to vector<8x64xf32>
    %167 = arith.addf %166, %165 : vector<8x64xf32>
    %168 = arith.divf %166, %167 : vector<8x64xf32>
    %169 = vector.extract_strided_slice %168 {offsets = [0, 0], sizes = [8, 32], strides = [1, 1]} : vector<8x64xf32> to vector<8x32xf32>
    %170 = vector.extract_strided_slice %168 {offsets = [0, 32], sizes = [8, 32], strides = [1, 1]} : vector<8x64xf32> to vector<8x32xf32>
    %171 = vector.extract_strided_slice %158 {offsets = [0, 64], sizes = [8, 32], strides = [1, 1]} : vector<8x96xf32> to vector<8x32xf32>
    %172 = vector.extract_strided_slice %160 {offsets = [0, 64], sizes = [8, 32], strides = [1, 1]} : vector<8x96xf32> to vector<8x32xf32>
    %173 = vector.broadcast %11 : vector<1x32xf32> to vector<8x32xf32>
    %174 = arith.addf %172, %173 : vector<8x32xf32>
    %175 = arith.mulf %169, %174 : vector<8x32xf32>
    %176 = arith.addf %171, %175 : vector<8x32xf32>
    %177 = math.tanh %176 : vector<8x32xf32>
    %178 = arith.subf %156, %177 : vector<8x32xf32>
    %179 = arith.mulf %170, %178 : vector<8x32xf32>
    %180 = arith.addf %177, %179 : vector<8x32xf32>
    %c48 = arith.constant 48 : index
    %c0_37 = arith.constant 0 : index
    %181 = vector.load %arg11[%c48, %c0_37] : memref<64x32xf32, #tpu.memory_space<vmem>>, vector<8x32xf32>
    tpu.vector_store %arg11[%c48, %c0_37], %180 {strides = array<i32>} : memref<64x32xf32, #tpu.memory_space<vmem>>, vector<8x32xf32>,
    %182 = vector.extract_strided_slice %7 {offsets = [56, 0], sizes = [8, 96], strides = [1, 1]} : vector<64x96xf32> to vector<8x96xf32>
    %183 = arith.truncf %180 : vector<8x32xf32> to vector<8x32xbf16>
    %cst_38 = arith.constant dense<0.000000e+00> : vector<8x96xf32>
    %184 = tpu.matmul %183, %9, %cst_38 {dimension_numbers = #tpu.dot_dimension_numbers<[1], [0], [0], [1], [0, 0, 1, 1], [], []>} : vector<8x32xbf16>, vector<32x96xbf16>, vector<8x96xf32> -> vector<8x96xf32>
    %185 = vector.extract_strided_slice %182 {offsets = [0, 0], sizes = [8, 64], strides = [1, 1]} : vector<8x96xf32> to vector<8x64xf32>
    %186 = vector.extract_strided_slice %184 {offsets = [0, 0], sizes = [8, 64], strides = [1, 1]} : vector<8x96xf32> to vector<8x64xf32>
    %187 = arith.addf %185, %186 : vector<8x64xf32>
    %188 = arith.negf %187 : vector<8x64xf32>
    %189 = math.exp %188 : vector<8x64xf32>
    %cst_39 = arith.constant 1.000000e+00 : f32
    %190 = vector.broadcast %cst_39 : f32 to vector<8x64xf32>
    %191 = arith.addf %190, %189 : vector<8x64xf32>
    %192 = arith.divf %190, %191 : vector<8x64xf32>
    %193 = vector.extract_strided_slice %192 {offsets = [0, 0], sizes = [8, 32], strides = [1, 1]} : vector<8x64xf32> to vector<8x32xf32>
    %194 = vector.extract_strided_slice %192 {offsets = [0, 32], sizes = [8, 32], strides = [1, 1]} : vector<8x64xf32> to vector<8x32xf32>
    %195 = vector.extract_strided_slice %182 {offsets = [0, 64], sizes = [8, 32], strides = [1, 1]} : vector<8x96xf32> to vector<8x32xf32>
    %196 = vector.extract_strided_slice %184 {offsets = [0, 64], sizes = [8, 32], strides = [1, 1]} : vector<8x96xf32> to vector<8x32xf32>
    %197 = vector.broadcast %11 : vector<1x32xf32> to vector<8x32xf32>
    %198 = arith.addf %196, %197 : vector<8x32xf32>
    %199 = arith.mulf %193, %198 : vector<8x32xf32>
    %200 = arith.addf %195, %199 : vector<8x32xf32>
    %201 = math.tanh %200 : vector<8x32xf32>
    %202 = arith.subf %180, %201 : vector<8x32xf32>
    %203 = arith.mulf %194, %202 : vector<8x32xf32>
    %204 = arith.addf %201, %203 : vector<8x32xf32>
    %c56 = arith.constant 56 : index
    %c0_40 = arith.constant 0 : index
    %205 = vector.load %arg11[%c56, %c0_40] : memref<64x32xf32, #tpu.memory_space<vmem>>, vector<8x32xf32>
    tpu.vector_store %arg11[%c56, %c0_40], %204 {strides = array<i32>} : memref<64x32xf32, #tpu.memory_space<vmem>>, vector<8x32xf32>,
    %c0_41 = arith.constant 0 : index
    %c0_42 = arith.constant 0 : index
    %c0_43 = arith.constant 0 : index
    %206 = vector.load %arg10[%c0_41, %c0_42, %c0_43] : memref<2x8x32xf32, #tpu.memory_space<vmem>>, vector<1x8x32xf32>
    %207 = vector.shape_cast %206 : vector<1x8x32xf32> to vector<8x32xf32>
    %208 = vector.shape_cast %204 : vector<8x32xf32> to vector<1x8x32xf32>
    tpu.vector_store %arg10[%c0_41, %c0_42, %c0_43], %208 {strides = array<i32>} : memref<2x8x32xf32, #tpu.memory_space<vmem>>, vector<1x8x32xf32>,
    %c0_44 = arith.constant 0 : index
    %c0_45 = arith.constant 0 : index
    %209 = vector.load %arg11[%c0_44, %c0_45] : memref<64x32xf32, #tpu.memory_space<vmem>>, vector<64x32xf32>
    %210 = arith.truncf %209 : vector<64x32xf32> to vector<64x32xbf16>
    %c1 = arith.constant 1 : index
    %c0_46 = arith.constant 0 : index
    %c0_47 = arith.constant 0 : index
    %211 = vector.load %arg3[%c1, %c0_46, %c0_47] : memref<2x32x96xbf16, #tpu.memory_space<vmem>>, vector<1x32x96xbf16>
    %212 = vector.shape_cast %211 : vector<1x32x96xbf16> to vector<32x96xbf16>
    %cst_48 = arith.constant dense<0.000000e+00> : vector<64x96xf32>
    %213 = tpu.matmul %210, %212, %cst_48 {dimension_numbers = #tpu.dot_dimension_numbers<[1], [0], [0], [1], [0, 0, 1, 1], [], []>} : vector<64x32xbf16>, vector<32x96xbf16>, vector<64x96xf32> -> vector<64x96xf32>
    %c1_49 = arith.constant 1 : index
    %c0_50 = arith.constant 0 : index
    %c0_51 = arith.constant 0 : index
    %214 = vector.load %arg5[%c1_49, %c0_50, %c0_51] : memref<2x1x96xf32, #tpu.memory_space<vmem>>, vector<1x1x96xf32>
    %215 = vector.shape_cast %214 : vector<1x1x96xf32> to vector<1x96xf32>
    %216 = vector.broadcast %215 : vector<1x96xf32> to vector<64x96xf32>
    %217 = arith.addf %213, %216 : vector<64x96xf32>
    %c1_52 = arith.constant 1 : index
    %c0_53 = arith.constant 0 : index
    %c0_54 = arith.constant 0 : index
    %218 = vector.load %arg4[%c1_52, %c0_53, %c0_54] : memref<2x32x96xbf16, #tpu.memory_space<vmem>>, vector<1x32x96xbf16>
    %219 = vector.shape_cast %218 : vector<1x32x96xbf16> to vector<32x96xbf16>
    %c1_55 = arith.constant 1 : index
    %c0_56 = arith.constant 0 : index
    %c0_57 = arith.constant 0 : index
    %220 = vector.load %arg6[%c1_55, %c0_56, %c0_57] : memref<2x1x32xf32, #tpu.memory_space<vmem>>, vector<1x1x32xf32>
    %221 = vector.shape_cast %220 : vector<1x1x32xf32> to vector<1x32xf32>
    %c1_58 = arith.constant 1 : index
    %c0_59 = arith.constant 0 : index
    %c0_60 = arith.constant 0 : index
    %222 = vector.load %arg2[%c1_58, %c0_59, %c0_60] : memref<2x8x32xf32, #tpu.memory_space<vmem>>, vector<1x8x32xf32>
    %223 = vector.shape_cast %222 : vector<1x8x32xf32> to vector<8x32xf32>
    %224 = vector.extract_strided_slice %217 {offsets = [0, 0], sizes = [8, 96], strides = [1, 1]} : vector<64x96xf32> to vector<8x96xf32>
    %225 = arith.truncf %223 : vector<8x32xf32> to vector<8x32xbf16>
    %cst_61 = arith.constant dense<0.000000e+00> : vector<8x96xf32>
    %226 = tpu.matmul %225, %219, %cst_61 {dimension_numbers = #tpu.dot_dimension_numbers<[1], [0], [0], [1], [0, 0, 1, 1], [], []>} : vector<8x32xbf16>, vector<32x96xbf16>, vector<8x96xf32> -> vector<8x96xf32>
    %227 = vector.extract_strided_slice %224 {offsets = [0, 0], sizes = [8, 64], strides = [1, 1]} : vector<8x96xf32> to vector<8x64xf32>
    %228 = vector.extract_strided_slice %226 {offsets = [0, 0], sizes = [8, 64], strides = [1, 1]} : vector<8x96xf32> to vector<8x64xf32>
    %229 = arith.addf %227, %228 : vector<8x64xf32>
    %230 = arith.negf %229 : vector<8x64xf32>
    %231 = math.exp %230 : vector<8x64xf32>
    %cst_62 = arith.constant 1.000000e+00 : f32
    %232 = vector.broadcast %cst_62 : f32 to vector<8x64xf32>
    %233 = arith.addf %232, %231 : vector<8x64xf32>
    %234 = arith.divf %232, %233 : vector<8x64xf32>
    %235 = vector.extract_strided_slice %234 {offsets = [0, 0], sizes = [8, 32], strides = [1, 1]} : vector<8x64xf32> to vector<8x32xf32>
    %236 = vector.extract_strided_slice %234 {offsets = [0, 32], sizes = [8, 32], strides = [1, 1]} : vector<8x64xf32> to vector<8x32xf32>
    %237 = vector.extract_strided_slice %224 {offsets = [0, 64], sizes = [8, 32], strides = [1, 1]} : vector<8x96xf32> to vector<8x32xf32>
    %238 = vector.extract_strided_slice %226 {offsets = [0, 64], sizes = [8, 32], strides = [1, 1]} : vector<8x96xf32> to vector<8x32xf32>
    %239 = vector.broadcast %221 : vector<1x32xf32> to vector<8x32xf32>
    %240 = arith.addf %238, %239 : vector<8x32xf32>
    %241 = arith.mulf %235, %240 : vector<8x32xf32>
    %242 = arith.addf %237, %241 : vector<8x32xf32>
    %243 = math.tanh %242 : vector<8x32xf32>
    %244 = arith.subf %223, %243 : vector<8x32xf32>
    %245 = arith.mulf %236, %244 : vector<8x32xf32>
    %246 = arith.addf %243, %245 : vector<8x32xf32>
    %c0_63 = arith.constant 0 : index
    %c0_64 = arith.constant 0 : index
    %247 = vector.load %arg11[%c0_63, %c0_64] : memref<64x32xf32, #tpu.memory_space<vmem>>, vector<8x32xf32>
    tpu.vector_store %arg11[%c0_63, %c0_64], %246 {strides = array<i32>} : memref<64x32xf32, #tpu.memory_space<vmem>>, vector<8x32xf32>,
    %248 = vector.extract_strided_slice %217 {offsets = [8, 0], sizes = [8, 96], strides = [1, 1]} : vector<64x96xf32> to vector<8x96xf32>
    %249 = arith.truncf %246 : vector<8x32xf32> to vector<8x32xbf16>
    %cst_65 = arith.constant dense<0.000000e+00> : vector<8x96xf32>
    %250 = tpu.matmul %249, %219, %cst_65 {dimension_numbers = #tpu.dot_dimension_numbers<[1], [0], [0], [1], [0, 0, 1, 1], [], []>} : vector<8x32xbf16>, vector<32x96xbf16>, vector<8x96xf32> -> vector<8x96xf32>
    %251 = vector.extract_strided_slice %248 {offsets = [0, 0], sizes = [8, 64], strides = [1, 1]} : vector<8x96xf32> to vector<8x64xf32>
    %252 = vector.extract_strided_slice %250 {offsets = [0, 0], sizes = [8, 64], strides = [1, 1]} : vector<8x96xf32> to vector<8x64xf32>
    %253 = arith.addf %251, %252 : vector<8x64xf32>
    %254 = arith.negf %253 : vector<8x64xf32>
    %255 = math.exp %254 : vector<8x64xf32>
    %cst_66 = arith.constant 1.000000e+00 : f32
    %256 = vector.broadcast %cst_66 : f32 to vector<8x64xf32>
    %257 = arith.addf %256, %255 : vector<8x64xf32>
    %258 = arith.divf %256, %257 : vector<8x64xf32>
    %259 = vector.extract_strided_slice %258 {offsets = [0, 0], sizes = [8, 32], strides = [1, 1]} : vector<8x64xf32> to vector<8x32xf32>
    %260 = vector.extract_strided_slice %258 {offsets = [0, 32], sizes = [8, 32], strides = [1, 1]} : vector<8x64xf32> to vector<8x32xf32>
    %261 = vector.extract_strided_slice %248 {offsets = [0, 64], sizes = [8, 32], strides = [1, 1]} : vector<8x96xf32> to vector<8x32xf32>
    %262 = vector.extract_strided_slice %250 {offsets = [0, 64], sizes = [8, 32], strides = [1, 1]} : vector<8x96xf32> to vector<8x32xf32>
    %263 = vector.broadcast %221 : vector<1x32xf32> to vector<8x32xf32>
    %264 = arith.addf %262, %263 : vector<8x32xf32>
    %265 = arith.mulf %259, %264 : vector<8x32xf32>
    %266 = arith.addf %261, %265 : vector<8x32xf32>
    %267 = math.tanh %266 : vector<8x32xf32>
    %268 = arith.subf %246, %267 : vector<8x32xf32>
    %269 = arith.mulf %260, %268 : vector<8x32xf32>
    %270 = arith.addf %267, %269 : vector<8x32xf32>
    %c8_67 = arith.constant 8 : index
    %c0_68 = arith.constant 0 : index
    %271 = vector.load %arg11[%c8_67, %c0_68] : memref<64x32xf32, #tpu.memory_space<vmem>>, vector<8x32xf32>
    tpu.vector_store %arg11[%c8_67, %c0_68], %270 {strides = array<i32>} : memref<64x32xf32, #tpu.memory_space<vmem>>, vector<8x32xf32>,
    %272 = vector.extract_strided_slice %217 {offsets = [16, 0], sizes = [8, 96], strides = [1, 1]} : vector<64x96xf32> to vector<8x96xf32>
    %273 = arith.truncf %270 : vector<8x32xf32> to vector<8x32xbf16>
    %cst_69 = arith.constant dense<0.000000e+00> : vector<8x96xf32>
    %274 = tpu.matmul %273, %219, %cst_69 {dimension_numbers = #tpu.dot_dimension_numbers<[1], [0], [0], [1], [0, 0, 1, 1], [], []>} : vector<8x32xbf16>, vector<32x96xbf16>, vector<8x96xf32> -> vector<8x96xf32>
    %275 = vector.extract_strided_slice %272 {offsets = [0, 0], sizes = [8, 64], strides = [1, 1]} : vector<8x96xf32> to vector<8x64xf32>
    %276 = vector.extract_strided_slice %274 {offsets = [0, 0], sizes = [8, 64], strides = [1, 1]} : vector<8x96xf32> to vector<8x64xf32>
    %277 = arith.addf %275, %276 : vector<8x64xf32>
    %278 = arith.negf %277 : vector<8x64xf32>
    %279 = math.exp %278 : vector<8x64xf32>
    %cst_70 = arith.constant 1.000000e+00 : f32
    %280 = vector.broadcast %cst_70 : f32 to vector<8x64xf32>
    %281 = arith.addf %280, %279 : vector<8x64xf32>
    %282 = arith.divf %280, %281 : vector<8x64xf32>
    %283 = vector.extract_strided_slice %282 {offsets = [0, 0], sizes = [8, 32], strides = [1, 1]} : vector<8x64xf32> to vector<8x32xf32>
    %284 = vector.extract_strided_slice %282 {offsets = [0, 32], sizes = [8, 32], strides = [1, 1]} : vector<8x64xf32> to vector<8x32xf32>
    %285 = vector.extract_strided_slice %272 {offsets = [0, 64], sizes = [8, 32], strides = [1, 1]} : vector<8x96xf32> to vector<8x32xf32>
    %286 = vector.extract_strided_slice %274 {offsets = [0, 64], sizes = [8, 32], strides = [1, 1]} : vector<8x96xf32> to vector<8x32xf32>
    %287 = vector.broadcast %221 : vector<1x32xf32> to vector<8x32xf32>
    %288 = arith.addf %286, %287 : vector<8x32xf32>
    %289 = arith.mulf %283, %288 : vector<8x32xf32>
    %290 = arith.addf %285, %289 : vector<8x32xf32>
    %291 = math.tanh %290 : vector<8x32xf32>
    %292 = arith.subf %270, %291 : vector<8x32xf32>
    %293 = arith.mulf %284, %292 : vector<8x32xf32>
    %294 = arith.addf %291, %293 : vector<8x32xf32>
    %c16_71 = arith.constant 16 : index
    %c0_72 = arith.constant 0 : index
    %295 = vector.load %arg11[%c16_71, %c0_72] : memref<64x32xf32, #tpu.memory_space<vmem>>, vector<8x32xf32>
    tpu.vector_store %arg11[%c16_71, %c0_72], %294 {strides = array<i32>} : memref<64x32xf32, #tpu.memory_space<vmem>>, vector<8x32xf32>,
    %296 = vector.extract_strided_slice %217 {offsets = [24, 0], sizes = [8, 96], strides = [1, 1]} : vector<64x96xf32> to vector<8x96xf32>
    %297 = arith.truncf %294 : vector<8x32xf32> to vector<8x32xbf16>
    %cst_73 = arith.constant dense<0.000000e+00> : vector<8x96xf32>
    %298 = tpu.matmul %297, %219, %cst_73 {dimension_numbers = #tpu.dot_dimension_numbers<[1], [0], [0], [1], [0, 0, 1, 1], [], []>} : vector<8x32xbf16>, vector<32x96xbf16>, vector<8x96xf32> -> vector<8x96xf32>
    %299 = vector.extract_strided_slice %296 {offsets = [0, 0], sizes = [8, 64], strides = [1, 1]} : vector<8x96xf32> to vector<8x64xf32>
    %300 = vector.extract_strided_slice %298 {offsets = [0, 0], sizes = [8, 64], strides = [1, 1]} : vector<8x96xf32> to vector<8x64xf32>
    %301 = arith.addf %299, %300 : vector<8x64xf32>
    %302 = arith.negf %301 : vector<8x64xf32>
    %303 = math.exp %302 : vector<8x64xf32>
    %cst_74 = arith.constant 1.000000e+00 : f32
    %304 = vector.broadcast %cst_74 : f32 to vector<8x64xf32>
    %305 = arith.addf %304, %303 : vector<8x64xf32>
    %306 = arith.divf %304, %305 : vector<8x64xf32>
    %307 = vector.extract_strided_slice %306 {offsets = [0, 0], sizes = [8, 32], strides = [1, 1]} : vector<8x64xf32> to vector<8x32xf32>
    %308 = vector.extract_strided_slice %306 {offsets = [0, 32], sizes = [8, 32], strides = [1, 1]} : vector<8x64xf32> to vector<8x32xf32>
    %309 = vector.extract_strided_slice %296 {offsets = [0, 64], sizes = [8, 32], strides = [1, 1]} : vector<8x96xf32> to vector<8x32xf32>
    %310 = vector.extract_strided_slice %298 {offsets = [0, 64], sizes = [8, 32], strides = [1, 1]} : vector<8x96xf32> to vector<8x32xf32>
    %311 = vector.broadcast %221 : vector<1x32xf32> to vector<8x32xf32>
    %312 = arith.addf %310, %311 : vector<8x32xf32>
    %313 = arith.mulf %307, %312 : vector<8x32xf32>
    %314 = arith.addf %309, %313 : vector<8x32xf32>
    %315 = math.tanh %314 : vector<8x32xf32>
    %316 = arith.subf %294, %315 : vector<8x32xf32>
    %317 = arith.mulf %308, %316 : vector<8x32xf32>
    %318 = arith.addf %315, %317 : vector<8x32xf32>
    %c24_75 = arith.constant 24 : index
    %c0_76 = arith.constant 0 : index
    %319 = vector.load %arg11[%c24_75, %c0_76] : memref<64x32xf32, #tpu.memory_space<vmem>>, vector<8x32xf32>
    tpu.vector_store %arg11[%c24_75, %c0_76], %318 {strides = array<i32>} : memref<64x32xf32, #tpu.memory_space<vmem>>, vector<8x32xf32>,
    %320 = vector.extract_strided_slice %217 {offsets = [32, 0], sizes = [8, 96], strides = [1, 1]} : vector<64x96xf32> to vector<8x96xf32>
    %321 = arith.truncf %318 : vector<8x32xf32> to vector<8x32xbf16>
    %cst_77 = arith.constant dense<0.000000e+00> : vector<8x96xf32>
    %322 = tpu.matmul %321, %219, %cst_77 {dimension_numbers = #tpu.dot_dimension_numbers<[1], [0], [0], [1], [0, 0, 1, 1], [], []>} : vector<8x32xbf16>, vector<32x96xbf16>, vector<8x96xf32> -> vector<8x96xf32>
    %323 = vector.extract_strided_slice %320 {offsets = [0, 0], sizes = [8, 64], strides = [1, 1]} : vector<8x96xf32> to vector<8x64xf32>
    %324 = vector.extract_strided_slice %322 {offsets = [0, 0], sizes = [8, 64], strides = [1, 1]} : vector<8x96xf32> to vector<8x64xf32>
    %325 = arith.addf %323, %324 : vector<8x64xf32>
    %326 = arith.negf %325 : vector<8x64xf32>
    %327 = math.exp %326 : vector<8x64xf32>
    %cst_78 = arith.constant 1.000000e+00 : f32
    %328 = vector.broadcast %cst_78 : f32 to vector<8x64xf32>
    %329 = arith.addf %328, %327 : vector<8x64xf32>
    %330 = arith.divf %328, %329 : vector<8x64xf32>
    %331 = vector.extract_strided_slice %330 {offsets = [0, 0], sizes = [8, 32], strides = [1, 1]} : vector<8x64xf32> to vector<8x32xf32>
    %332 = vector.extract_strided_slice %330 {offsets = [0, 32], sizes = [8, 32], strides = [1, 1]} : vector<8x64xf32> to vector<8x32xf32>
    %333 = vector.extract_strided_slice %320 {offsets = [0, 64], sizes = [8, 32], strides = [1, 1]} : vector<8x96xf32> to vector<8x32xf32>
    %334 = vector.extract_strided_slice %322 {offsets = [0, 64], sizes = [8, 32], strides = [1, 1]} : vector<8x96xf32> to vector<8x32xf32>
    %335 = vector.broadcast %221 : vector<1x32xf32> to vector<8x32xf32>
    %336 = arith.addf %334, %335 : vector<8x32xf32>
    %337 = arith.mulf %331, %336 : vector<8x32xf32>
    %338 = arith.addf %333, %337 : vector<8x32xf32>
    %339 = math.tanh %338 : vector<8x32xf32>
    %340 = arith.subf %318, %339 : vector<8x32xf32>
    %341 = arith.mulf %332, %340 : vector<8x32xf32>
    %342 = arith.addf %339, %341 : vector<8x32xf32>
    %c32_79 = arith.constant 32 : index
    %c0_80 = arith.constant 0 : index
    %343 = vector.load %arg11[%c32_79, %c0_80] : memref<64x32xf32, #tpu.memory_space<vmem>>, vector<8x32xf32>
    tpu.vector_store %arg11[%c32_79, %c0_80], %342 {strides = array<i32>} : memref<64x32xf32, #tpu.memory_space<vmem>>, vector<8x32xf32>,
    %344 = vector.extract_strided_slice %217 {offsets = [40, 0], sizes = [8, 96], strides = [1, 1]} : vector<64x96xf32> to vector<8x96xf32>
    %345 = arith.truncf %342 : vector<8x32xf32> to vector<8x32xbf16>
    %cst_81 = arith.constant dense<0.000000e+00> : vector<8x96xf32>
    %346 = tpu.matmul %345, %219, %cst_81 {dimension_numbers = #tpu.dot_dimension_numbers<[1], [0], [0], [1], [0, 0, 1, 1], [], []>} : vector<8x32xbf16>, vector<32x96xbf16>, vector<8x96xf32> -> vector<8x96xf32>
    %347 = vector.extract_strided_slice %344 {offsets = [0, 0], sizes = [8, 64], strides = [1, 1]} : vector<8x96xf32> to vector<8x64xf32>
    %348 = vector.extract_strided_slice %346 {offsets = [0, 0], sizes = [8, 64], strides = [1, 1]} : vector<8x96xf32> to vector<8x64xf32>
    %349 = arith.addf %347, %348 : vector<8x64xf32>
    %350 = arith.negf %349 : vector<8x64xf32>
    %351 = math.exp %350 : vector<8x64xf32>
    %cst_82 = arith.constant 1.000000e+00 : f32
    %352 = vector.broadcast %cst_82 : f32 to vector<8x64xf32>
    %353 = arith.addf %352, %351 : vector<8x64xf32>
    %354 = arith.divf %352, %353 : vector<8x64xf32>
    %355 = vector.extract_strided_slice %354 {offsets = [0, 0], sizes = [8, 32], strides = [1, 1]} : vector<8x64xf32> to vector<8x32xf32>
    %356 = vector.extract_strided_slice %354 {offsets = [0, 32], sizes = [8, 32], strides = [1, 1]} : vector<8x64xf32> to vector<8x32xf32>
    %357 = vector.extract_strided_slice %344 {offsets = [0, 64], sizes = [8, 32], strides = [1, 1]} : vector<8x96xf32> to vector<8x32xf32>
    %358 = vector.extract_strided_slice %346 {offsets = [0, 64], sizes = [8, 32], strides = [1, 1]} : vector<8x96xf32> to vector<8x32xf32>
    %359 = vector.broadcast %221 : vector<1x32xf32> to vector<8x32xf32>
    %360 = arith.addf %358, %359 : vector<8x32xf32>
    %361 = arith.mulf %355, %360 : vector<8x32xf32>
    %362 = arith.addf %357, %361 : vector<8x32xf32>
    %363 = math.tanh %362 : vector<8x32xf32>
    %364 = arith.subf %342, %363 : vector<8x32xf32>
    %365 = arith.mulf %356, %364 : vector<8x32xf32>
    %366 = arith.addf %363, %365 : vector<8x32xf32>
    %c40_83 = arith.constant 40 : index
    %c0_84 = arith.constant 0 : index
    %367 = vector.load %arg11[%c40_83, %c0_84] : memref<64x32xf32, #tpu.memory_space<vmem>>, vector<8x32xf32>
    tpu.vector_store %arg11[%c40_83, %c0_84], %366 {strides = array<i32>} : memref<64x32xf32, #tpu.memory_space<vmem>>, vector<8x32xf32>,
    %368 = vector.extract_strided_slice %217 {offsets = [48, 0], sizes = [8, 96], strides = [1, 1]} : vector<64x96xf32> to vector<8x96xf32>
    %369 = arith.truncf %366 : vector<8x32xf32> to vector<8x32xbf16>
    %cst_85 = arith.constant dense<0.000000e+00> : vector<8x96xf32>
    %370 = tpu.matmul %369, %219, %cst_85 {dimension_numbers = #tpu.dot_dimension_numbers<[1], [0], [0], [1], [0, 0, 1, 1], [], []>} : vector<8x32xbf16>, vector<32x96xbf16>, vector<8x96xf32> -> vector<8x96xf32>
    %371 = vector.extract_strided_slice %368 {offsets = [0, 0], sizes = [8, 64], strides = [1, 1]} : vector<8x96xf32> to vector<8x64xf32>
    %372 = vector.extract_strided_slice %370 {offsets = [0, 0], sizes = [8, 64], strides = [1, 1]} : vector<8x96xf32> to vector<8x64xf32>
    %373 = arith.addf %371, %372 : vector<8x64xf32>
    %374 = arith.negf %373 : vector<8x64xf32>
    %375 = math.exp %374 : vector<8x64xf32>
    %cst_86 = arith.constant 1.000000e+00 : f32
    %376 = vector.broadcast %cst_86 : f32 to vector<8x64xf32>
    %377 = arith.addf %376, %375 : vector<8x64xf32>
    %378 = arith.divf %376, %377 : vector<8x64xf32>
    %379 = vector.extract_strided_slice %378 {offsets = [0, 0], sizes = [8, 32], strides = [1, 1]} : vector<8x64xf32> to vector<8x32xf32>
    %380 = vector.extract_strided_slice %378 {offsets = [0, 32], sizes = [8, 32], strides = [1, 1]} : vector<8x64xf32> to vector<8x32xf32>
    %381 = vector.extract_strided_slice %368 {offsets = [0, 64], sizes = [8, 32], strides = [1, 1]} : vector<8x96xf32> to vector<8x32xf32>
    %382 = vector.extract_strided_slice %370 {offsets = [0, 64], sizes = [8, 32], strides = [1, 1]} : vector<8x96xf32> to vector<8x32xf32>
    %383 = vector.broadcast %221 : vector<1x32xf32> to vector<8x32xf32>
    %384 = arith.addf %382, %383 : vector<8x32xf32>
    %385 = arith.mulf %379, %384 : vector<8x32xf32>
    %386 = arith.addf %381, %385 : vector<8x32xf32>
    %387 = math.tanh %386 : vector<8x32xf32>
    %388 = arith.subf %366, %387 : vector<8x32xf32>
    %389 = arith.mulf %380, %388 : vector<8x32xf32>
    %390 = arith.addf %387, %389 : vector<8x32xf32>
    %c48_87 = arith.constant 48 : index
    %c0_88 = arith.constant 0 : index
    %391 = vector.load %arg11[%c48_87, %c0_88] : memref<64x32xf32, #tpu.memory_space<vmem>>, vector<8x32xf32>
    tpu.vector_store %arg11[%c48_87, %c0_88], %390 {strides = array<i32>} : memref<64x32xf32, #tpu.memory_space<vmem>>, vector<8x32xf32>,
    %392 = vector.extract_strided_slice %217 {offsets = [56, 0], sizes = [8, 96], strides = [1, 1]} : vector<64x96xf32> to vector<8x96xf32>
    %393 = arith.truncf %390 : vector<8x32xf32> to vector<8x32xbf16>
    %cst_89 = arith.constant dense<0.000000e+00> : vector<8x96xf32>
    %394 = tpu.matmul %393, %219, %cst_89 {dimension_numbers = #tpu.dot_dimension_numbers<[1], [0], [0], [1], [0, 0, 1, 1], [], []>} : vector<8x32xbf16>, vector<32x96xbf16>, vector<8x96xf32> -> vector<8x96xf32>
    %395 = vector.extract_strided_slice %392 {offsets = [0, 0], sizes = [8, 64], strides = [1, 1]} : vector<8x96xf32> to vector<8x64xf32>
    %396 = vector.extract_strided_slice %394 {offsets = [0, 0], sizes = [8, 64], strides = [1, 1]} : vector<8x96xf32> to vector<8x64xf32>
    %397 = arith.addf %395, %396 : vector<8x64xf32>
    %398 = arith.negf %397 : vector<8x64xf32>
    %399 = math.exp %398 : vector<8x64xf32>
    %cst_90 = arith.constant 1.000000e+00 : f32
    %400 = vector.broadcast %cst_90 : f32 to vector<8x64xf32>
    %401 = arith.addf %400, %399 : vector<8x64xf32>
    %402 = arith.divf %400, %401 : vector<8x64xf32>
    %403 = vector.extract_strided_slice %402 {offsets = [0, 0], sizes = [8, 32], strides = [1, 1]} : vector<8x64xf32> to vector<8x32xf32>
    %404 = vector.extract_strided_slice %402 {offsets = [0, 32], sizes = [8, 32], strides = [1, 1]} : vector<8x64xf32> to vector<8x32xf32>
    %405 = vector.extract_strided_slice %392 {offsets = [0, 64], sizes = [8, 32], strides = [1, 1]} : vector<8x96xf32> to vector<8x32xf32>
    %406 = vector.extract_strided_slice %394 {offsets = [0, 64], sizes = [8, 32], strides = [1, 1]} : vector<8x96xf32> to vector<8x32xf32>
    %407 = vector.broadcast %221 : vector<1x32xf32> to vector<8x32xf32>
    %408 = arith.addf %406, %407 : vector<8x32xf32>
    %409 = arith.mulf %403, %408 : vector<8x32xf32>
    %410 = arith.addf %405, %409 : vector<8x32xf32>
    %411 = math.tanh %410 : vector<8x32xf32>
    %412 = arith.subf %390, %411 : vector<8x32xf32>
    %413 = arith.mulf %404, %412 : vector<8x32xf32>
    %414 = arith.addf %411, %413 : vector<8x32xf32>
    %c56_91 = arith.constant 56 : index
    %c0_92 = arith.constant 0 : index
    %415 = vector.load %arg11[%c56_91, %c0_92] : memref<64x32xf32, #tpu.memory_space<vmem>>, vector<8x32xf32>
    tpu.vector_store %arg11[%c56_91, %c0_92], %414 {strides = array<i32>} : memref<64x32xf32, #tpu.memory_space<vmem>>, vector<8x32xf32>,
    %c1_93 = arith.constant 1 : index
    %c0_94 = arith.constant 0 : index
    %c0_95 = arith.constant 0 : index
    %416 = vector.load %arg10[%c1_93, %c0_94, %c0_95] : memref<2x8x32xf32, #tpu.memory_space<vmem>>, vector<1x8x32xf32>
    %417 = vector.shape_cast %416 : vector<1x8x32xf32> to vector<8x32xf32>
    %418 = vector.shape_cast %414 : vector<8x32xf32> to vector<1x8x32xf32>
    tpu.vector_store %arg10[%c1_93, %c0_94, %c0_95], %418 {strides = array<i32>} : memref<2x8x32xf32, #tpu.memory_space<vmem>>, vector<1x8x32xf32>,
    %c0_96 = arith.constant 0 : index
    %c0_97 = arith.constant 0 : index
    %419 = vector.load %arg11[%c0_96, %c0_97] : memref<64x32xf32, #tpu.memory_space<vmem>>, vector<64x32xf32>
    %420 = arith.truncf %419 : vector<64x32xf32> to vector<64x32xbf16>
    %c0_98 = arith.constant 0 : index
    %c0_99 = arith.constant 0 : index
    %421 = vector.load %arg7[%c0_98, %c0_99] : memref<32x128xbf16, #tpu.memory_space<vmem>>, vector<32x128xbf16>
    %cst_100 = arith.constant dense<0.000000e+00> : vector<64x128xf32>
    %422 = tpu.matmul %420, %421, %cst_100 {dimension_numbers = #tpu.dot_dimension_numbers<[1], [0], [0], [1], [0, 0, 1, 1], [], []>} : vector<64x32xbf16>, vector<32x128xbf16>, vector<64x128xf32> -> vector<64x128xf32>
    %c0_101 = arith.constant 0 : index
    %c0_102 = arith.constant 0 : index
    %423 = vector.load %arg8[%c0_101, %c0_102] : memref<1x128xf32, #tpu.memory_space<vmem>>, vector<1x128xf32>
    %424 = vector.broadcast %423 : vector<1x128xf32> to vector<64x128xf32>
    %425 = arith.addf %422, %424 : vector<64x128xf32>
    %cst_103 = arith.constant dense<0xFF800000> : vector<64xf32>
    %426 = vector.multi_reduction <maximumf>, %425, %cst_103 [1] : vector<64x128xf32> to vector<64xf32>
    %427 = vector.shape_cast %426 : vector<64xf32> to vector<64x1xf32>
    %428 = vector.broadcast %427 : vector<64x1xf32> to vector<64x128xf32>
    %429 = arith.subf %425, %428 : vector<64x128xf32>
    %430 = math.exp %429 : vector<64x128xf32>
    %cst_104 = arith.constant dense<0.000000e+00> : vector<64xf32>
    %431 = vector.multi_reduction <add>, %430, %cst_104 [1] : vector<64x128xf32> to vector<64xf32>
    %432 = vector.shape_cast %431 : vector<64xf32> to vector<64x1xf32>
    %433 = math.log %432 : vector<64x1xf32>
    %434 = vector.broadcast %427 : vector<64x1xf32> to vector<64x128xf32>
    %435 = arith.subf %425, %434 : vector<64x128xf32>
    %436 = vector.broadcast %433 : vector<64x1xf32> to vector<64x128xf32>
    %437 = arith.subf %435, %436 : vector<64x128xf32>
    %c0_105 = arith.constant 0 : index
    %c0_106 = arith.constant 0 : index
    %438 = vector.load %arg9[%c0_105, %c0_106] : memref<64x128xf32, #tpu.memory_space<vmem>>, vector<64x128xf32>
    tpu.vector_store %arg9[%c0_105, %c0_106], %437 {strides = array<i32>} : memref<64x128xf32, #tpu.memory_space<vmem>>, vector<64x128xf32>,
    return
  }
  func.func @transform_0(%arg0: i32) -> (i32, i32) {
    %c0_i32 = arith.constant 0 : i32
    %c0_i32_0 = arith.constant 0 : i32
    %c0_i32_1 = arith.constant 0 : i32
    return %c0_i32, %c0_i32_0 : i32, i32
  }
  func.func @transform_1(%arg0: i32) -> (i32, i32, i32) {
    %c0_i32 = arith.constant 0 : i32
    %c0_i32_0 = arith.constant 0 : i32
    %c0_i32_1 = arith.constant 0 : i32
    %c0_i32_2 = arith.constant 0 : i32
    return %c0_i32, %c0_i32_0, %c0_i32_1 : i32, i32, i32
  }
  func.func @transform_2(%arg0: i32) -> (i32, i32, i32) {
    %c0_i32 = arith.constant 0 : i32
    %c0_i32_0 = arith.constant 0 : i32
    %c0_i32_1 = arith.constant 0 : i32
    %c0_i32_2 = arith.constant 0 : i32
    return %c0_i32, %c0_i32_0, %c0_i32_1 : i32, i32, i32
  }
  func.func @transform_3(%arg0: i32) -> (i32, i32, i32) {
    %c0_i32 = arith.constant 0 : i32
    %c0_i32_0 = arith.constant 0 : i32
    %c0_i32_1 = arith.constant 0 : i32
    %c0_i32_2 = arith.constant 0 : i32
    return %c0_i32, %c0_i32_0, %c0_i32_1 : i32, i32, i32
  }
  func.func @transform_4(%arg0: i32) -> (i32, i32, i32) {
    %c0_i32 = arith.constant 0 : i32
    %c0_i32_0 = arith.constant 0 : i32
    %c0_i32_1 = arith.constant 0 : i32
    %c0_i32_2 = arith.constant 0 : i32
    return %c0_i32, %c0_i32_0, %c0_i32_1 : i32, i32, i32
  }
  func.func @transform_5(%arg0: i32) -> (i32, i32, i32) {
    %c0_i32 = arith.constant 0 : i32
    %c0_i32_0 = arith.constant 0 : i32
    %c0_i32_1 = arith.constant 0 : i32
    %c0_i32_2 = arith.constant 0 : i32
    return %c0_i32, %c0_i32_0, %c0_i32_1 : i32, i32, i32
  }
  func.func @transform_6(%arg0: i32) -> (i32, i32) {
    %c0_i32 = arith.constant 0 : i32
    %c0_i32_0 = arith.constant 0 : i32
    %c0_i32_1 = arith.constant 0 : i32
    return %c0_i32, %c0_i32_0 : i32, i32
  }
  func.func @transform_7(%arg0: i32) -> (i32, i32) {
    %c0_i32 = arith.constant 0 : i32
    %c0_i32_0 = arith.constant 0 : i32
    %c0_i32_1 = arith.constant 0 : i32
    return %c0_i32, %c0_i32_0 : i32, i32
  }
  func.func @transform_8(%arg0: i32) -> (i32, i32) {
    %c0_i32 = arith.constant 0 : i32
    %c0_i32_0 = arith.constant 0 : i32
    %c0_i32_1 = arith.constant 0 : i32
    return %c0_i32, %c0_i32_0 : i32, i32
  }
  func.func @transform_9(%arg0: i32) -> (i32, i32, i32) {
    %c0_i32 = arith.constant 0 : i32
    %c0_i32_0 = arith.constant 0 : i32
    %c0_i32_1 = arith.constant 0 : i32
    %c0_i32_2 = arith.constant 0 : i32
    return %c0_i32, %c0_i32_0, %c0_i32_1 : i32, i32, i32
  }
}

</mosaic_0001>

<llo_original>
// kernel: char_rnn_forward.1
$region0: #{char_rnn_forward.1}
  #allocation0 [shape = 'u32[]', space=smem, size = 0x4, offset = 0x4, fixed_abs, tag = 'smem constant byte address 0x4 - core index']
  #allocation1 [shape = 'u32[72,128]{1,0:T(1,128)}', space=vmem, size = 0x9000, scoped, tag = 'internal scratch']
  #allocation2 [shape = 'f32[64,32]{1,0:T(8,128)}', space=vmem, size = 0x8000, scoped, tag = 'scratch operand']
  %s0 = inlined_call_operand.vmem [shape: bf16[64,32], index: 0, kind: input, shape index: {}]
  %s1 = inlined_call_operand.vmem [shape: f32[2,8,32], index: 1, kind: input, shape index: {}, may-alias: {1,9}]
  %s2 = inlined_call_operand.vmem [shape: bf16[2,32,96], index: 2, kind: input, shape index: {}]
  %s3 = inlined_call_operand.vmem [shape: bf16[2,32,96], index: 3, kind: input, shape index: {}]
  %s4 = inlined_call_operand.vmem [shape: f32[2,1,96], index: 4, kind: input, shape index: {}]
  %s5 = inlined_call_operand.vmem [shape: f32[2,1,32], index: 5, kind: input, shape index: {}]
  %s6 = inlined_call_operand.vmem [shape: bf16[32,128], index: 6, kind: input, shape index: {}]
  %s7 = inlined_call_operand.vmem [shape: f32[1,128], index: 7, kind: input, shape index: {}]
  %s8 = inlined_call_operand.vmem [shape: f32[64,128], index: 8, kind: output, shape index: {0}]
  %s9 = inlined_call_operand.vmem [shape: f32[2,8,32], index: 9, kind: output, shape index: {1}, may-alias: {1,9}]
  %10 = xla_tuple %s8, %s9
  %s11 = sld [smem:[#allocation0]]
  $region50: #{char_rnn_forward.1} parent=0
    _
  %s13 = ssub.s32 1, %s11
  %s14 = scalar_select 0, %s13, %s11
  // Predicated region
  $region2: #{char_rnn_forward.1} parent=0 // pred_check
    _
  $region3: #{char_rnn_forward.1} parent=0 // pred_check_branch
    %16 = sbr.rel (0) target = $region5
  $region4: #{char_rnn_forward.1} parent=0 // pred_region
    _
  $region5: #{char_rnn_forward.1} parent=0 // pred_fallthru
    _
  // Predicated region
  $region6: #{char_rnn_forward.1} parent=0 // pred_check
    _
  $region7: #{char_rnn_forward.1} parent=0 // pred_check_branch
    %18 = sbr.rel (0) target = $region9
  $region8: #{char_rnn_forward.1} parent=0 // pred_region
    _
  $region9: #{char_rnn_forward.1} parent=0 // pred_fallthru
    _
  // Predicated region
  $region10: #{char_rnn_forward.1} parent=0 // pred_check
    _
  $region11: #{char_rnn_forward.1} parent=0 // pred_check_branch
    %20 = sbr.rel (0) target = $region13
  $region12: #{char_rnn_forward.1} parent=0 // pred_region
    _
  $region13: #{char_rnn_forward.1} parent=0 // pred_fallthru
    _
  // Predicated region
  $region14: #{char_rnn_forward.1} parent=0 // pred_check
    _
  $region15: #{char_rnn_forward.1} parent=0 // pred_check_branch
    %22 = sbr.rel (0) target = $region17
  $region16: #{char_rnn_forward.1} parent=0 // pred_region
    _
  $region17: #{char_rnn_forward.1} parent=0 // pred_fallthru
    _
  // Predicated region
  $region18: #{char_rnn_forward.1} parent=0 // pred_check
    _
  $region19: #{char_rnn_forward.1} parent=0 // pred_check_branch
    %24 = sbr.rel (0) target = $region21
  $region20: #{char_rnn_forward.1} parent=0 // pred_region
    _
  $region21: #{char_rnn_forward.1} parent=0 // pred_fallthru
    _
  // Predicated region
  $region22: #{char_rnn_forward.1} parent=0 // pred_check
    _
  $region23: #{char_rnn_forward.1} parent=0 // pred_check_branch
    %26 = sbr.rel (0) target = $region25
  $region24: #{char_rnn_forward.1} parent=0 // pred_region
    _
  $region25: #{char_rnn_forward.1} parent=0 // pred_fallthru
    _
  // Predicated region
  $region26: #{char_rnn_forward.1} parent=0 // pred_check
    _
  $region27: #{char_rnn_forward.1} parent=0 // pred_check_branch
    %28 = sbr.rel (0) target = $region29
  $region28: #{char_rnn_forward.1} parent=0 // pred_region
    _
  $region29: #{char_rnn_forward.1} parent=0 // pred_fallthru
    _
  // Predicated region
  $region30: #{char_rnn_forward.1} parent=0 // pred_check
    _
  $region31: #{char_rnn_forward.1} parent=0 // pred_check_branch
    %30 = sbr.rel (0) target = $region33
  $region32: #{char_rnn_forward.1} parent=0 // pred_region
    _
  $region33: #{char_rnn_forward.1} parent=0 // pred_fallthru
    _
  %v32 = vld [vmem:[%s0] sm:$0xf]
  %v33 = vld [vmem:[%s0 + $0x4] sm:$0xf]
  %v34 = vld [vmem:[%s0 + $0x8] sm:$0xf]
  %v35 = vld [vmem:[%s0 + $0xc] sm:$0xf]
  %v36 = vld [vmem:[%s0 + $0x10] sm:$0xf]
  %v37 = vld [vmem:[%s0 + $0x14] sm:$0xf]
  %v38 = vld [vmem:[%s0 + $0x18] sm:$0xf]
  %v39 = vld [vmem:[%s0 + $0x1c] sm:$0xf]
  %v40 = vld [vmem:[%s2] sm:$0xf]
  %v41 = vld [vmem:[%s2 + $0x4] sm:$0xf]
  %v42 = vld [vmem:[%s2 + $0x8] sm:$0xf]
  %v43 = vld [vmem:[%s2 + $0xc] sm:$0xf]
  %v44 = vld [vmem:[%s4] sm:$0x1]
  %v46 = vperm.slane %v44, 0
  %v56 = vunpack.c.l.b16 %v32
  %v57 = vunpack.c.l.b16 %v33
  %v58 = vunpack.c.l.b16 %v34
  %v59 = vunpack.c.l.b16 %v35
  %v60 = vunpack.c.l.b16 %v36
  %v61 = vunpack.c.l.b16 %v37
  %v62 = vunpack.c.l.b16 %v38
  %v63 = vunpack.c.l.b16 %v39
  %v64 = vpack.c.b16 %v57, %v56
  %v65 = vpack.c.b16 %v59, %v58
  %v66 = vpack.c.b16 %v61, %v60
  %v67 = vpack.c.b16 %v63, %v62
  %v72 = vunpack.c.l.b16 %v40
  %v73 = vunpack.c.l.b16 %v41
  %v74 = vunpack.c.l.b16 %v42
  %v75 = vunpack.c.l.b16 %v43
  %v76 = vpack.c.b16 %v73, %v72
  %v77 = vpack.c.b16 %v75, %v74
  %vm80 = vcmask 261120
  %v82 = vsel %vm80, %v64, 0
  %v85 = vsel %vm80, %v65, 0
  %v88 = vsel %vm80, %v66, 0
  %v91 = vsel %vm80, %v67, 0
  %93 = vmatpush.bf16.msra.mxu0 0
  %94 = vmatpush.bf16.msra.mxu0 0
  %95 = vmatpush.bf16.msra.mxu0 0
  %96 = vmatpush.bf16.msra.mxu0 0
  %97 = vmatpush.bf16.msra.mxu0 0
  %98 = vmatpush.bf16.msra.mxu0 0
  %99 = vmatpush.bf16.msra.mxu0 %v77
  %100 = vmatpush.bf16.msra.mxu0 %v76
  %101 = vmatmul.bf16.gmra.mxu0 %v82
  %v102 = vpop.f32.mrf.mxu0
  %v103 = vadd.f32 %v46, %v102
  %v104 = vpop.f32.mrf.mxu0
  %v105 = vadd.f32 %v46, %v104
  %106 = vmatmul.bf16.gmra.mxu0 %v85
  %v107 = vpop.f32.mrf.mxu0
  %v108 = vadd.f32 %v46, %v107
  %v109 = vpop.f32.mrf.mxu0
  %v110 = vadd.f32 %v46, %v109
  %111 = vmatmul.bf16.gmra.mxu0 %v88
  %v112 = vpop.f32.mrf.mxu0
  %v113 = vadd.f32 %v46, %v112
  %v114 = vpop.f32.mrf.mxu0
  %v115 = vadd.f32 %v46, %v114
  %116 = vmatmul.bf16.gmra.mxu0 %v91
  %v117 = vpop.f32.mrf.mxu0
  %v118 = vadd.f32 %v46, %v117
  %v119 = vpop.f32.mrf.mxu0
  %v120 = vadd.f32 %v46, %v119
  %121 = vdwg.mxu0
  %v122 = vld [vmem:[%s3] sm:$0xf]
  %v123 = vld [vmem:[%s3 + $0x4] sm:$0xf]
  %v124 = vld [vmem:[%s3 + $0x8] sm:$0xf]
  %v125 = vld [vmem:[%s3 + $0xc] sm:$0xf]
  %v126 = vld [vmem:[%s5] sm:$0x1]
  %v127 = vld [vmem:[%s1] sm:$0xff]
  %v128 = vpack.c.bf16 %v127, %v127
  %v133 = vunpack.c.l.b16 %v122
  %v134 = vunpack.c.l.b16 %v123
  %v135 = vunpack.c.l.b16 %v124
  %v136 = vunpack.c.l.b16 %v125
  %v137 = vpack.c.b16 %v134, %v133
  %v138 = vpack.c.b16 %v136, %v135
  %v142 = vsel %vm80, %v128, 0
  %144 = vmatpush.bf16.msra.mxu0 0
  %145 = vmatpush.bf16.msra.mxu0 0
  %146 = vmatpush.bf16.msra.mxu0 0
  %147 = vmatpush.bf16.msra.mxu0 0
  %148 = vmatpush.bf16.msra.mxu0 0
  %149 = vmatpush.bf16.msra.mxu0 0
  %150 = vmatpush.bf16.msra.mxu0 %v138
  %151 = vmatpush.bf16.msra.mxu0 %v137
  %152 = vmatmul.bf16.gmra.mxu0 %v142
  %v153 = vpop.f32.mrf.mxu0
  %v154 = vadd.f32 0.0, %v153
  %v155 = vpop.f32.mrf.mxu0
  %156 = vdwg.mxu0
  %v157 = vadd.f32 %v103, %v154
  %v158 = vxor.u32 %v157, 2147483648
  %v159 = vmul.f32 %v158, 1.442695
  %v160 = vpow.pop %v159
  %v161 = vadd.f32 %v160, 1.0
  %v162 = vrcp.pop %v161
  %v163 = vmul.f32 %v161, %v162
  %v164 = vsub.f32 1.0, %v163
  %v165 = vmul.f32 %v162, %v164
  %v166 = vadd.f32 %v162, %v165
  %vm167 = vweird.f32 %v161
  %vm168 = vweird.f32 %v162
  %vm169 = vmor %vm167, %vm168
  %v170 = vsel %vm169, %v162, %v166
  %v171 = vand.u32 2147483647, %v161
  %vm172 = vcmp.eq.f32.partialorder %v171, 8.507059e+37
  %v173 = vand.u32 %v161, 2147483648
  %v174 = vor.u32 1.1754944e-38, %v173
  %v175 = vsel %vm172, %v174, %v170
  %v176 = vmul.f32 1.0, %v175
  %v178 = vperm.slane %v126, 0
  %179 = vrot.lane.b32.xlu0 %v178, 64
  %v180 = vpop.permute.xlu0 %179
  %v182 = vadd.f32 %v154, %v180
  %184 = vrot.lane.b32.xlu0 %v182, 64
  %v185 = vpop.permute.xlu0 %184
  %v187 = vmul.f32 %v176, %v185
  %189 = vrot.lane.b32.xlu0 %v187, 64
  %v190 = vpop.permute.xlu0 %189
  %v192 = vadd.f32 %v103, %v190
  %v193 = vtanh.pop %v192
  %195 = vrot.lane.b32.xlu0 %v193, 64
  %v196 = vpop.permute.xlu0 %195
  %v198 = vsub.f32 %v127, %v196
  %200 = vrot.lane.b32.xlu0 %v198, 32
  %v201 = vpop.permute.xlu0 %200
  %v203 = vmul.f32 %v176, %v201
  %205 = vrot.lane.b32.xlu0 %v203, 32
  %v206 = vpop.permute.xlu0 %205
  %v208 = vadd.f32 %v193, %v206
  %210 = vrot.lane.b32.xlu0 %v208, 64
  %v211 = vpop.permute.xlu0 %210
  %213 = vst.msk [vmem:[#allocation2] sm:$0xff] %vm80, %v211
  %v214 = vpack.c.bf16 %v208, %v208
  %216 = vrot.lane.b32.xlu0 %v214, 64
  %v217 = vpop.permute.xlu0 %216
  %v219 = vsel %vm80, %v217, 0
  %221 = vmatpush.bf16.msra.mxu0 0
  %222 = vmatpush.bf16.msra.mxu0 0
  %223 = vmatpush.bf16.msra.mxu0 0
  %224 = vmatpush.bf16.msra.mxu0 0
  %225 = vmatpush.bf16.msra.mxu0 0
  %226 = vmatpush.bf16.msra.mxu0 0
  %227 = vmatpush.bf16.msra.mxu0 %v138
  %228 = vmatpush.bf16.msra.mxu0 %v137
  %229 = vmatmul.bf16.gmra.mxu0 %v219
  %v230 = vpop.f32.mrf.mxu0
  %v231 = vadd.f32 0.0, %v230
  %v232 = vpop.f32.mrf.mxu0
  %233 = vdwg.mxu0
  %v234 = vadd.f32 %v105, %v231
  %v235 = vxor.u32 %v234, 2147483648
  %v236 = vmul.f32 %v235, 1.442695
  %v237 = vpow.pop %v236
  %v238 = vadd.f32 %v237, 1.0
  %v239 = vrcp.pop %v238
  %v240 = vmul.f32 %v238, %v239
  %v241 = vsub.f32 1.0, %v240
  %v242 = vmul.f32 %v239, %v241
  %v243 = vadd.f32 %v239, %v242
  %vm244 = vweird.f32 %v238
  %vm245 = vweird.f32 %v239
  %vm246 = vmor %vm244, %vm245
  %v247 = vsel %vm246, %v239, %v243
  %v248 = vand.u32 2147483647, %v238
  %vm249 = vcmp.eq.f32.partialorder %v248, 8.507059e+37
  %v250 = vand.u32 %v238, 2147483648
  %v251 = vor.u32 1.1754944e-38, %v250
  %v252 = vsel %vm249, %v251, %v247
  %v253 = vmul.f32 1.0, %v252
  %v254 = vadd.f32 %v231, %v180
  %256 = vrot.lane.b32.xlu0 %v254, 64
  %v257 = vpop.permute.xlu0 %256
  %v259 = vmul.f32 %v253, %v257
  %261 = vrot.lane.b32.xlu0 %v259, 64
  %v262 = vpop.permute.xlu0 %261
  %v264 = vadd.f32 %v105, %v262
  %v265 = vtanh.pop %v264
  %v266 = vsub.f32 %v208, %v265
  %268 = vrot.lane.b32.xlu0 %v266, 96
  %v269 = vpop.permute.xlu0 %268
  %v271 = vmul.f32 %v253, %v269
  %273 = vrot.lane.b32.xlu0 %v271, 32
  %v274 = vpop.permute.xlu0 %273
  %v276 = vadd.f32 %v265, %v274
  %278 = vrot.lane.b32.xlu0 %v276, 64
  %v279 = vpop.permute.xlu0 %278
  %281 = vst.msk [vmem:[#allocation2 + $0x8] sm:$0xff] %vm80, %v279
  %v282 = vpack.c.bf16 %v276, %v276
  %284 = vrot.lane.b32.xlu0 %v282, 64
  %v285 = vpop.permute.xlu0 %284
  %v287 = vsel %vm80, %v285, 0
  %289 = vmatpush.bf16.msra.mxu0 0
  %290 = vmatpush.bf16.msra.mxu0 0
  %291 = vmatpush.bf16.msra.mxu0 0
  %292 = vmatpush.bf16.msra.mxu0 0
  %293 = vmatpush.bf16.msra.mxu0 0
  %294 = vmatpush.bf16.msra.mxu0 0
  %295 = vmatpush.bf16.msra.mxu0 %v138
  %296 = vmatpush.bf16.msra.mxu0 %v137
  %297 = vmatmul.bf16.gmra.mxu0 %v287
  %v298 = vpop.f32.mrf.mxu0
  %v299 = vadd.f32 0.0, %v298
  %v300 = vpop.f32.mrf.mxu0
  %301 = vdwg.mxu0
  %v302 = vadd.f32 %v108, %v299
  %v303 = vxor.u32 %v302, 2147483648
  %v304 = vmul.f32 %v303, 1.442695
  %v305 = vpow.pop %v304
  %v306 = vadd.f32 %v305, 1.0
  %v307 = vrcp.pop %v306
  %v308 = vmul.f32 %v306, %v307
  %v309 = vsub.f32 1.0, %v308
  %v310 = vmul.f32 %v307, %v309
  %v311 = vadd.f32 %v307, %v310
  %vm312 = vweird.f32 %v306
  %vm313 = vweird.f32 %v307
  %vm314 = vmor %vm312, %vm313
  %v315 = vsel %vm314, %v307, %v311
  %v316 = vand.u32 2147483647, %v306
  %vm317 = vcmp.eq.f32.partialorder %v316, 8.507059e+37
  %v318 = vand.u32 %v306, 2147483648
  %v319 = vor.u32 1.1754944e-38, %v318
  %v320 = vsel %vm317, %v319, %v315
  %v321 = vmul.f32 1.0, %v320
  %v322 = vadd.f32 %v299, %v180
  %324 = vrot.lane.b32.xlu0 %v322, 64
  %v325 = vpop.permute.xlu0 %324
  %v327 = vmul.f32 %v321, %v325
  %329 = vrot.lane.b32.xlu0 %v327, 64
  %v330 = vpop.permute.xlu0 %329
  %v332 = vadd.f32 %v108, %v330
  %v333 = vtanh.pop %v332
  %v334 = vsub.f32 %v276, %v333
  %336 = vrot.lane.b32.xlu0 %v334, 96
  %v337 = vpop.permute.xlu0 %336
  %v339 = vmul.f32 %v321, %v337
  %341 = vrot.lane.b32.xlu0 %v339, 32
  %v342 = vpop.permute.xlu0 %341
  %v344 = vadd.f32 %v333, %v342
  %346 = vrot.lane.b32.xlu0 %v344, 64
  %v347 = vpop.permute.xlu0 %346
  %349 = vst.msk [vmem:[#allocation2 + $0x10] sm:$0xff] %vm80, %v347
  %v350 = vpack.c.bf16 %v344, %v344
  %352 = vrot.lane.b32.xlu0 %v350, 64
  %v353 = vpop.permute.xlu0 %352
  %v355 = vsel %vm80, %v353, 0
  %357 = vmatpush.bf16.msra.mxu0 0
  %358 = vmatpush.bf16.msra.mxu0 0
  %359 = vmatpush.bf16.msra.mxu0 0
  %360 = vmatpush.bf16.msra.mxu0 0
  %361 = vmatpush.bf16.msra.mxu0 0
  %362 = vmatpush.bf16.msra.mxu0 0
  %363 = vmatpush.bf16.msra.mxu0 %v138
  %364 = vmatpush.bf16.msra.mxu0 %v137
  %365 = vmatmul.bf16.gmra.mxu0 %v355
  %v366 = vpop.f32.mrf.mxu0
  %v367 = vadd.f32 0.0, %v366
  %v368 = vpop.f32.mrf.mxu0
  %369 = vdwg.mxu0
  %v370 = vadd.f32 %v110, %v367
  %v371 = vxor.u32 %v370, 2147483648
  %v372 = vmul.f32 %v371, 1.442695
  %v373 = vpow.pop %v372
  %v374 = vadd.f32 %v373, 1.0
  %v375 = vrcp.pop %v374
  %v376 = vmul.f32 %v374, %v375
  %v377 = vsub.f32 1.0, %v376
  %v378 = vmul.f32 %v375, %v377
  %v379 = vadd.f32 %v375, %v378
  %vm380 = vweird.f32 %v374
  %vm381 = vweird.f32 %v375
  %vm382 = vmor %vm380, %vm381
  %v383 = vsel %vm382, %v375, %v379
  %v384 = vand.u32 2147483647, %v374
  %vm385 = vcmp.eq.f32.partialorder %v384, 8.507059e+37
  %v386 = vand.u32 %v374, 2147483648
  %v387 = vor.u32 1.1754944e-38, %v386
  %v388 = vsel %vm385, %v387, %v383
  %v389 = vmul.f32 1.0, %v388
  %v390 = vadd.f32 %v367, %v180
  %392 = vrot.lane.b32.xlu0 %v390, 64
  %v393 = vpop.permute.xlu0 %392
  %v395 = vmul.f32 %v389, %v393
  %397 = vrot.lane.b32.xlu0 %v395, 64
  %v398 = vpop.permute.xlu0 %397
  %v400 = vadd.f32 %v110, %v398
  %v401 = vtanh.pop %v400
  %v402 = vsub.f32 %v344, %v401
  %404 = vrot.lane.b32.xlu0 %v402, 96
  %v405 = vpop.permute.xlu0 %404
  %v407 = vmul.f32 %v389, %v405
  %409 = vrot.lane.b32.xlu0 %v407, 32
  %v410 = vpop.permute.xlu0 %409
  %v412 = vadd.f32 %v401, %v410
  %414 = vrot.lane.b32.xlu0 %v412, 64
  %v415 = vpop.permute.xlu0 %414
  %417 = vst.msk [vmem:[#allocation2 + $0x18] sm:$0xff] %vm80, %v415
  %v418 = vpack.c.bf16 %v412, %v412
  %420 = vrot.lane.b32.xlu0 %v418, 64
  %v421 = vpop.permute.xlu0 %420
  %v423 = vsel %vm80, %v421, 0
  %425 = vmatpush.bf16.msra.mxu0 0
  %426 = vmatpush.bf16.msra.mxu0 0
  %427 = vmatpush.bf16.msra.mxu0 0
  %428 = vmatpush.bf16.msra.mxu0 0
  %429 = vmatpush.bf16.msra.mxu0 0
  %430 = vmatpush.bf16.msra.mxu0 0
  %431 = vmatpush.bf16.msra.mxu0 %v138
  %432 = vmatpush.bf16.msra.mxu0 %v137
  %433 = vmatmul.bf16.gmra.mxu0 %v423
  %v434 = vpop.f32.mrf.mxu0
  %v435 = vadd.f32 0.0, %v434
  %v436 = vpop.f32.mrf.mxu0
  %437 = vdwg.mxu0
  %v438 = vadd.f32 %v113, %v435
  %v439 = vxor.u32 %v438, 2147483648
  %v440 = vmul.f32 %v439, 1.442695
  %v441 = vpow.pop %v440
  %v442 = vadd.f32 %v441, 1.0
  %v443 = vrcp.pop %v442
  %v444 = vmul.f32 %v442, %v443
  %v445 = vsub.f32 1.0, %v444
  %v446 = vmul.f32 %v443, %v445
  %v447 = vadd.f32 %v443, %v446
  %vm448 = vweird.f32 %v442
  %vm449 = vweird.f32 %v443
  %vm450 = vmor %vm448, %vm449
  %v451 = vsel %vm450, %v443, %v447
  %v452 = vand.u32 2147483647, %v442
  %vm453 = vcmp.eq.f32.partialorder %v452, 8.507059e+37
  %v454 = vand.u32 %v442, 2147483648
  %v455 = vor.u32 1.1754944e-38, %v454
  %v456 = vsel %vm453, %v455, %v451
  %v457 = vmul.f32 1.0, %v456
  %v458 = vadd.f32 %v435, %v180
  %460 = vrot.lane.b32.xlu0 %v458, 64
  %v461 = vpop.permute.xlu0 %460
  %v463 = vmul.f32 %v457, %v461
  %465 = vrot.lane.b32.xlu0 %v463, 64
  %v466 = vpop.permute.xlu0 %465
  %v468 = vadd.f32 %v113, %v466
  %v469 = vtanh.pop %v468
  %v470 = vsub.f32 %v412, %v469
  %472 = vrot.lane.b32.xlu0 %v470, 96
  %v473 = vpop.permute.xlu0 %472
  %v475 = vmul.f32 %v457, %v473
  %477 = vrot.lane.b32.xlu0 %v475, 32
  %v478 = vpop.permute.xlu0 %477
  %v480 = vadd.f32 %v469, %v478
  %482 = vrot.lane.b32.xlu0 %v480, 64
  %v483 = vpop.permute.xlu0 %482
  %485 = vst.msk [vmem:[#allocation2 + $0x20] sm:$0xff] %vm80, %v483
  %v486 = vpack.c.bf16 %v480, %v480
  %488 = vrot.lane.b32.xlu0 %v486, 64
  %v489 = vpop.permute.xlu0 %488
  %v491 = vsel %vm80, %v489, 0
  %493 = vmatpush.bf16.msra.mxu0 0
  %494 = vmatpush.bf16.msra.mxu0 0
  %495 = vmatpush.bf16.msra.mxu0 0
  %496 = vmatpush.bf16.msra.mxu0 0
  %497 = vmatpush.bf16.msra.mxu0 0
  %498 = vmatpush.bf16.msra.mxu0 0
  %499 = vmatpush.bf16.msra.mxu0 %v138
  %500 = vmatpush.bf16.msra.mxu0 %v137
  %501 = vmatmul.bf16.gmra.mxu0 %v491
  %v502 = vpop.f32.mrf.mxu0
  %v503 = vadd.f32 0.0, %v502
  %v504 = vpop.f32.mrf.mxu0
  %505 = vdwg.mxu0
  %v506 = vadd.f32 %v115, %v503
  %v507 = vxor.u32 %v506, 2147483648
  %v508 = vmul.f32 %v507, 1.442695
  %v509 = vpow.pop %v508
  %v510 = vadd.f32 %v509, 1.0
  %v511 = vrcp.pop %v510
  %v512 = vmul.f32 %v510, %v511
  %v513 = vsub.f32 1.0, %v512
  %v514 = vmul.f32 %v511, %v513
  %v515 = vadd.f32 %v511, %v514
  %vm516 = vweird.f32 %v510
  %vm517 = vweird.f32 %v511
  %vm518 = vmor %vm516, %vm517
  %v519 = vsel %vm518, %v511, %v515
  %v520 = vand.u32 2147483647, %v510
  %vm521 = vcmp.eq.f32.partialorder %v520, 8.507059e+37
  %v522 = vand.u32 %v510, 2147483648
  %v523 = vor.u32 1.1754944e-38, %v522
  %v524 = vsel %vm521, %v523, %v519
  %v525 = vmul.f32 1.0, %v524
  %v526 = vadd.f32 %v503, %v180
  %528 = vrot.lane.b32.xlu0 %v526, 64
  %v529 = vpop.permute.xlu0 %528
  %v531 = vmul.f32 %v525, %v529
  %533 = vrot.lane.b32.xlu0 %v531, 64
  %v534 = vpop.permute.xlu0 %533
  %v536 = vadd.f32 %v115, %v534
  %v537 = vtanh.pop %v536
  %v538 = vsub.f32 %v480, %v537
  %540 = vrot.lane.b32.xlu0 %v538, 96
  %v541 = vpop.permute.xlu0 %540
  %v543 = vmul.f32 %v525, %v541
  %545 = vrot.lane.b32.xlu0 %v543, 32
  %v546 = vpop.permute.xlu0 %545
  %v548 = vadd.f32 %v537, %v546
  %550 = vrot.lane.b32.xlu0 %v548, 64
  %v551 = vpop.permute.xlu0 %550
  %553 = vst.msk [vmem:[#allocation2 + $0x28] sm:$0xff] %vm80, %v551
  %v554 = vpack.c.bf16 %v548, %v548
  %556 = vrot.lane.b32.xlu0 %v554, 64
  %v557 = vpop.permute.xlu0 %556
  %v559 = vsel %vm80, %v557, 0
  %561 = vmatpush.bf16.msra.mxu0 0
  %562 = vmatpush.bf16.msra.mxu0 0
  %563 = vmatpush.bf16.msra.mxu0 0
  %564 = vmatpush.bf16.msra.mxu0 0
  %565 = vmatpush.bf16.msra.mxu0 0
  %566 = vmatpush.bf16.msra.mxu0 0
  %567 = vmatpush.bf16.msra.mxu0 %v138
  %568 = vmatpush.bf16.msra.mxu0 %v137
  %569 = vmatmul.bf16.gmra.mxu0 %v559
  %v570 = vpop.f32.mrf.mxu0
  %v571 = vadd.f32 0.0, %v570
  %v572 = vpop.f32.mrf.mxu0
  %573 = vdwg.mxu0
  %v574 = vadd.f32 %v118, %v571
  %v575 = vxor.u32 %v574, 2147483648
  %v576 = vmul.f32 %v575, 1.442695
  %v577 = vpow.pop %v576
  %v578 = vadd.f32 %v577, 1.0
  %v579 = vrcp.pop %v578
  %v580 = vmul.f32 %v578, %v579
  %v581 = vsub.f32 1.0, %v580
  %v582 = vmul.f32 %v579, %v581
  %v583 = vadd.f32 %v579, %v582
  %vm584 = vweird.f32 %v578
  %vm585 = vweird.f32 %v579
  %vm586 = vmor %vm584, %vm585
  %v587 = vsel %vm586, %v579, %v583
  %v588 = vand.u32 2147483647, %v578
  %vm589 = vcmp.eq.f32.partialorder %v588, 8.507059e+37
  %v590 = vand.u32 %v578, 2147483648
  %v591 = vor.u32 1.1754944e-38, %v590
  %v592 = vsel %vm589, %v591, %v587
  %v593 = vmul.f32 1.0, %v592
  %v594 = vadd.f32 %v571, %v180
  %596 = vrot.lane.b32.xlu0 %v594, 64
  %v597 = vpop.permute.xlu0 %596
  %v599 = vmul.f32 %v593, %v597
  %601 = vrot.lane.b32.xlu0 %v599, 64
  %v602 = vpop.permute.xlu0 %601
  %v604 = vadd.f32 %v118, %v602
  %v605 = vtanh.pop %v604
  %v606 = vsub.f32 %v548, %v605
  %608 = vrot.lane.b32.xlu0 %v606, 96
  %v609 = vpop.permute.xlu0 %608
  %v611 = vmul.f32 %v593, %v609
  %613 = vrot.lane.b32.xlu0 %v611, 32
  %v614 = vpop.permute.xlu0 %613
  %v616 = vadd.f32 %v605, %v614
  %618 = vrot.lane.b32.xlu0 %v616, 64
  %v619 = vpop.permute.xlu0 %618
  %621 = vst.msk [vmem:[#allocation2 + $0x30] sm:$0xff] %vm80, %v619
  %v622 = vpack.c.bf16 %v616, %v616
  %624 = vrot.lane.b32.xlu0 %v622, 64
  %v625 = vpop.permute.xlu0 %624
  %v627 = vsel %vm80, %v625, 0
  %629 = vmatpush.bf16.msra.mxu0 0
  %630 = vmatpush.bf16.msra.mxu0 0
  %631 = vmatpush.bf16.msra.mxu0 0
  %632 = vmatpush.bf16.msra.mxu0 0
  %633 = vmatpush.bf16.msra.mxu0 0
  %634 = vmatpush.bf16.msra.mxu0 0
  %635 = vmatpush.bf16.msra.mxu0 %v138
  %636 = vmatpush.bf16.msra.mxu0 %v137
  %637 = vmatmul.bf16.gmra.mxu0 %v627
  %v638 = vpop.f32.mrf.mxu0
  %v639 = vadd.f32 0.0, %v638
  %v640 = vpop.f32.mrf.mxu0
  %641 = vdwg.mxu0
  %v642 = vadd.f32 %v120, %v639
  %v643 = vxor.u32 %v642, 2147483648
  %v644 = vmul.f32 %v643, 1.442695
  %v645 = vpow.pop %v644
  %v646 = vadd.f32 %v645, 1.0
  %v647 = vrcp.pop %v646
  %v648 = vmul.f32 %v646, %v647
  %v649 = vsub.f32 1.0, %v648
  %v650 = vmul.f32 %v647, %v649
  %v651 = vadd.f32 %v647, %v650
  %vm652 = vweird.f32 %v646
  %vm653 = vweird.f32 %v647
  %vm654 = vmor %vm652, %vm653
  %v655 = vsel %vm654, %v647, %v651
  %v656 = vand.u32 2147483647, %v646
  %vm657 = vcmp.eq.f32.partialorder %v656, 8.507059e+37
  %v658 = vand.u32 %v646, 2147483648
  %v659 = vor.u32 1.1754944e-38, %v658
  %v660 = vsel %vm657, %v659, %v655
  %v661 = vmul.f32 1.0, %v660
  %v662 = vadd.f32 %v639, %v180
  %664 = vrot.lane.b32.xlu0 %v662, 64
  %v665 = vpop.permute.xlu0 %664
  %v667 = vmul.f32 %v661, %v665
  %669 = vrot.lane.b32.xlu0 %v667, 64
  %v670 = vpop.permute.xlu0 %669
  %v672 = vadd.f32 %v120, %v670
  %v673 = vtanh.pop %v672
  %v674 = vsub.f32 %v616, %v673
  %676 = vrot.lane.b32.xlu0 %v674, 96
  %v677 = vpop.permute.xlu0 %676
  %v679 = vmul.f32 %v661, %v677
  %681 = vrot.lane.b32.xlu0 %v679, 32
  %v682 = vpop.permute.xlu0 %681
  %v684 = vadd.f32 %v673, %v682
  %686 = vrot.lane.b32.xlu0 %v684, 64
  %v687 = vpop.permute.xlu0 %686
  %689 = vst.msk [vmem:[#allocation2 + $0x38] sm:$0xff] %vm80, %v687
  %690 = vst.msk [vmem:[%s9] sm:$0xff] %vm80, %v687
  %v691 = vld [vmem:[#allocation2] sm:$0xff]
  %v692 = vld [vmem:[#allocation2 + $0x8] sm:$0xff]
  %v693 = vld [vmem:[#allocation2 + $0x10] sm:$0xff]
  %v694 = vld [vmem:[#allocation2 + $0x18] sm:$0xff]
  %v695 = vld [vmem:[#allocation2 + $0x20] sm:$0xff]
  %v696 = vld [vmem:[#allocation2 + $0x28] sm:$0xff]
  %v697 = vld [vmem:[#allocation2 + $0x30] sm:$0xff]
  %v698 = vld [vmem:[#allocation2 + $0x38] sm:$0xff]
  %v699 = vpack.c.bf16 %v692, %v691
  %v700 = vpack.c.bf16 %v694, %v693
  %v701 = vpack.c.bf16 %v696, %v695
  %v702 = vpack.c.bf16 %v698, %v697
  %s703 = scalar_lea.vmem %s2, 16
  %v704 = vld [vmem:[%s703] sm:$0xf]
  %v705 = vld [vmem:[%s703 + $0x4] sm:$0xf]
  %v706 = vld [vmem:[%s703 + $0x8] sm:$0xf]
  %v707 = vld [vmem:[%s703 + $0xc] sm:$0xf]
  %s708 = scalar_lea.vmem %s4, 1
  %v709 = vld [vmem:[%s708] sm:$0x1]
  %v711 = vperm.slane %v709, 0
  %v717 = vunpack.c.l.b16 %v704
  %v718 = vunpack.c.l.b16 %v705
  %v719 = vunpack.c.l.b16 %v706
  %v720 = vunpack.c.l.b16 %v707
  %v721 = vpack.c.b16 %v718, %v717
  %v722 = vpack.c.b16 %v720, %v719
  %v726 = vsel %vm80, %v699, 0
  %v729 = vsel %vm80, %v700, 0
  %v732 = vsel %vm80, %v701, 0
  %v735 = vsel %vm80, %v702, 0
  %737 = vmatpush.bf16.msra.mxu0 0
  %738 = vmatpush.bf16.msra.mxu0 0
  %739 = vmatpush.bf16.msra.mxu0 0
  %740 = vmatpush.bf16.msra.mxu0 0
  %741 = vmatpush.bf16.msra.mxu0 0
  %742 = vmatpush.bf16.msra.mxu0 0
  %743 = vmatpush.bf16.msra.mxu0 %v722
  %744 = vmatpush.bf16.msra.mxu0 %v721
  %745 = vmatmul.bf16.gmra.mxu0 %v726
  %v746 = vpop.f32.mrf.mxu0
  %v747 = vadd.f32 %v711, %v746
  %v748 = vpop.f32.mrf.mxu0
  %v749 = vadd.f32 %v711, %v748
  %750 = vmatmul.bf16.gmra.mxu0 %v729
  %v751 = vpop.f32.mrf.mxu0
  %v752 = vadd.f32 %v711, %v751
  %v753 = vpop.f32.mrf.mxu0
  %v754 = vadd.f32 %v711, %v753
  %755 = vmatmul.bf16.gmra.mxu0 %v732
  %v756 = vpop.f32.mrf.mxu0
  %v757 = vadd.f32 %v711, %v756
  %v758 = vpop.f32.mrf.mxu0
  %v759 = vadd.f32 %v711, %v758
  %760 = vmatmul.bf16.gmra.mxu0 %v735
  %v761 = vpop.f32.mrf.mxu0
  %v762 = vadd.f32 %v711, %v761
  %v763 = vpop.f32.mrf.mxu0
  %v764 = vadd.f32 %v711, %v763
  %765 = vdwg.mxu0
  %s766 = scalar_lea.vmem %s3, 16
  %v767 = vld [vmem:[%s766] sm:$0xf]
  %v768 = vld [vmem:[%s766 + $0x4] sm:$0xf]
  %v769 = vld [vmem:[%s766 + $0x8] sm:$0xf]
  %v770 = vld [vmem:[%s766 + $0xc] sm:$0xf]
  %s771 = scalar_lea.vmem %s5, 1
  %v772 = vld [vmem:[%s771] sm:$0x1]
  %s773 = scalar_lea.vmem %s1, 8
  %v774 = vld [vmem:[%s773] sm:$0xff]
  %v775 = vpack.c.bf16 %v774, %v774
  %v780 = vunpack.c.l.b16 %v767
  %v781 = vunpack.c.l.b16 %v768
  %v782 = vunpack.c.l.b16 %v769
  %v783 = vunpack.c.l.b16 %v770
  %v784 = vpack.c.b16 %v781, %v780
  %v785 = vpack.c.b16 %v783, %v782
  %v789 = vsel %vm80, %v775, 0
  %791 = vmatpush.bf16.msra.mxu0 0
  %792 = vmatpush.bf16.msra.mxu0 0
  %793 = vmatpush.bf16.msra.mxu0 0
  %794 = vmatpush.bf16.msra.mxu0 0
  %795 = vmatpush.bf16.msra.mxu0 0
  %796 = vmatpush.bf16.msra.mxu0 0
  %797 = vmatpush.bf16.msra.mxu0 %v785
  %798 = vmatpush.bf16.msra.mxu0 %v784
  %799 = vmatmul.bf16.gmra.mxu0 %v789
  %v800 = vpop.f32.mrf.mxu0
  %v801 = vadd.f32 0.0, %v800
  %v802 = vpop.f32.mrf.mxu0
  %803 = vdwg.mxu0
  %v804 = vadd.f32 %v747, %v801
  %v805 = vxor.u32 %v804, 2147483648
  %v806 = vmul.f32 %v805, 1.442695
  %v807 = vpow.pop %v806
  %v808 = vadd.f32 %v807, 1.0
  %v809 = vrcp.pop %v808
  %v810 = vmul.f32 %v808, %v809
  %v811 = vsub.f32 1.0, %v810
  %v812 = vmul.f32 %v809, %v811
  %v813 = vadd.f32 %v809, %v812
  %vm814 = vweird.f32 %v808
  %vm815 = vweird.f32 %v809
  %vm816 = vmor %vm814, %vm815
  %v817 = vsel %vm816, %v809, %v813
  %v818 = vand.u32 2147483647, %v808
  %vm819 = vcmp.eq.f32.partialorder %v818, 8.507059e+37
  %v820 = vand.u32 %v808, 2147483648
  %v821 = vor.u32 1.1754944e-38, %v820
  %v822 = vsel %vm819, %v821, %v817
  %v823 = vmul.f32 1.0, %v822
  %v825 = vperm.slane %v772, 0
  %826 = vrot.lane.b32.xlu0 %v825, 64
  %v827 = vpop.permute.xlu0 %826
  %v829 = vadd.f32 %v801, %v827
  %831 = vrot.lane.b32.xlu0 %v829, 64
  %v832 = vpop.permute.xlu0 %831
  %v834 = vmul.f32 %v823, %v832
  %836 = vrot.lane.b32.xlu0 %v834, 64
  %v837 = vpop.permute.xlu0 %836
  %v839 = vadd.f32 %v747, %v837
  %v840 = vtanh.pop %v839
  %842 = vrot.lane.b32.xlu0 %v840, 64
  %v843 = vpop.permute.xlu0 %842
  %v845 = vsub.f32 %v774, %v843
  %847 = vrot.lane.b32.xlu0 %v845, 32
  %v848 = vpop.permute.xlu0 %847
  %v850 = vmul.f32 %v823, %v848
  %852 = vrot.lane.b32.xlu0 %v850, 32
  %v853 = vpop.permute.xlu0 %852
  %v855 = vadd.f32 %v840, %v853
  %857 = vrot.lane.b32.xlu0 %v855, 64
  %v858 = vpop.permute.xlu0 %857
  %860 = vst.msk [vmem:[#allocation2] sm:$0xff] %vm80, %v858
  %v861 = vpack.c.bf16 %v855, %v855
  %863 = vrot.lane.b32.xlu0 %v861, 64
  %v864 = vpop.permute.xlu0 %863
  %v866 = vsel %vm80, %v864, 0
  %868 = vmatpush.bf16.msra.mxu0 0
  %869 = vmatpush.bf16.msra.mxu0 0
  %870 = vmatpush.bf16.msra.mxu0 0
  %871 = vmatpush.bf16.msra.mxu0 0
  %872 = vmatpush.bf16.msra.mxu0 0
  %873 = vmatpush.bf16.msra.mxu0 0
  %874 = vmatpush.bf16.msra.mxu0 %v785
  %875 = vmatpush.bf16.msra.mxu0 %v784
  %876 = vmatmul.bf16.gmra.mxu0 %v866
  %v877 = vpop.f32.mrf.mxu0
  %v878 = vadd.f32 0.0, %v877
  %v879 = vpop.f32.mrf.mxu0
  %880 = vdwg.mxu0
  %v881 = vadd.f32 %v749, %v878
  %v882 = vxor.u32 %v881, 2147483648
  %v883 = vmul.f32 %v882, 1.442695
  %v884 = vpow.pop %v883
  %v885 = vadd.f32 %v884, 1.0
  %v886 = vrcp.pop %v885
  %v887 = vmul.f32 %v885, %v886
  %v888 = vsub.f32 1.0, %v887
  %v889 = vmul.f32 %v886, %v888
  %v890 = vadd.f32 %v886, %v889
  %vm891 = vweird.f32 %v885
  %vm892 = vweird.f32 %v886
  %vm893 = vmor %vm891, %vm892
  %v894 = vsel %vm893, %v886, %v890
  %v895 = vand.u32 2147483647, %v885
  %vm896 = vcmp.eq.f32.partialorder %v895, 8.507059e+37
  %v897 = vand.u32 %v885, 2147483648
  %v898 = vor.u32 1.1754944e-38, %v897
  %v899 = vsel %vm896, %v898, %v894
  %v900 = vmul.f32 1.0, %v899
  %v901 = vadd.f32 %v878, %v827
  %903 = vrot.lane.b32.xlu0 %v901, 64
  %v904 = vpop.permute.xlu0 %903
  %v906 = vmul.f32 %v900, %v904
  %908 = vrot.lane.b32.xlu0 %v906, 64
  %v909 = vpop.permute.xlu0 %908
  %v911 = vadd.f32 %v749, %v909
  %v912 = vtanh.pop %v911
  %v913 = vsub.f32 %v855, %v912
  %915 = vrot.lane.b32.xlu0 %v913, 96
  %v916 = vpop.permute.xlu0 %915
  %v918 = vmul.f32 %v900, %v916
  %920 = vrot.lane.b32.xlu0 %v918, 32
  %v921 = vpop.permute.xlu0 %920
  %v923 = vadd.f32 %v912, %v921
  %925 = vrot.lane.b32.xlu0 %v923, 64
  %v926 = vpop.permute.xlu0 %925
  %928 = vst.msk [vmem:[#allocation2 + $0x8] sm:$0xff] %vm80, %v926
  %v929 = vpack.c.bf16 %v923, %v923
  %931 = vrot.lane.b32.xlu0 %v929, 64
  %v932 = vpop.permute.xlu0 %931
  %v934 = vsel %vm80, %v932, 0
  %936 = vmatpush.bf16.msra.mxu0 0
  %937 = vmatpush.bf16.msra.mxu0 0
  %938 = vmatpush.bf16.msra.mxu0 0
  %939 = vmatpush.bf16.msra.mxu0 0
  %940 = vmatpush.bf16.msra.mxu0 0
  %941 = vmatpush.bf16.msra.mxu0 0
  %942 = vmatpush.bf16.msra.mxu0 %v785
  %943 = vmatpush.bf16.msra.mxu0 %v784
  %944 = vmatmul.bf16.gmra.mxu0 %v934
  %v945 = vpop.f32.mrf.mxu0
  %v946 = vadd.f32 0.0, %v945
  %v947 = vpop.f32.mrf.mxu0
  %948 = vdwg.mxu0
  %v949 = vadd.f32 %v752, %v946
  %v950 = vxor.u32 %v949, 2147483648
  %v951 = vmul.f32 %v950, 1.442695
  %v952 = vpow.pop %v951
  %v953 = vadd.f32 %v952, 1.0
  %v954 = vrcp.pop %v953
  %v955 = vmul.f32 %v953, %v954
  %v956 = vsub.f32 1.0, %v955
  %v957 = vmul.f32 %v954, %v956
  %v958 = vadd.f32 %v954, %v957
  %vm959 = vweird.f32 %v953
  %vm960 = vweird.f32 %v954
  %vm961 = vmor %vm959, %vm960
  %v962 = vsel %vm961, %v954, %v958
  %v963 = vand.u32 2147483647, %v953
  %vm964 = vcmp.eq.f32.partialorder %v963, 8.507059e+37
  %v965 = vand.u32 %v953, 2147483648
  %v966 = vor.u32 1.1754944e-38, %v965
  %v967 = vsel %vm964, %v966, %v962
  %v968 = vmul.f32 1.0, %v967
  %v969 = vadd.f32 %v946, %v827
  %971 = vrot.lane.b32.xlu0 %v969, 64
  %v972 = vpop.permute.xlu0 %971
  %v974 = vmul.f32 %v968, %v972
  %976 = vrot.lane.b32.xlu0 %v974, 64
  %v977 = vpop.permute.xlu0 %976
  %v979 = vadd.f32 %v752, %v977
  %v980 = vtanh.pop %v979
  %v981 = vsub.f32 %v923, %v980
  %983 = vrot.lane.b32.xlu0 %v981, 96
  %v984 = vpop.permute.xlu0 %983
  %v986 = vmul.f32 %v968, %v984
  %988 = vrot.lane.b32.xlu0 %v986, 32
  %v989 = vpop.permute.xlu0 %988
  %v991 = vadd.f32 %v980, %v989
  %993 = vrot.lane.b32.xlu0 %v991, 64
  %v994 = vpop.permute.xlu0 %993
  %996 = vst.msk [vmem:[#allocation2 + $0x10] sm:$0xff] %vm80, %v994
  %v997 = vpack.c.bf16 %v991, %v991
  %999 = vrot.lane.b32.xlu0 %v997, 64
  %v1000 = vpop.permute.xlu0 %999
  %v1002 = vsel %vm80, %v1000, 0
  %1004 = vmatpush.bf16.msra.mxu0 0
  %1005 = vmatpush.bf16.msra.mxu0 0
  %1006 = vmatpush.bf16.msra.mxu0 0
  %1007 = vmatpush.bf16.msra.mxu0 0
  %1008 = vmatpush.bf16.msra.mxu0 0
  %1009 = vmatpush.bf16.msra.mxu0 0
  %1010 = vmatpush.bf16.msra.mxu0 %v785
  %1011 = vmatpush.bf16.msra.mxu0 %v784
  %1012 = vmatmul.bf16.gmra.mxu0 %v1002
  %v1013 = vpop.f32.mrf.mxu0
  %v1014 = vadd.f32 0.0, %v1013
  %v1015 = vpop.f32.mrf.mxu0
  %1016 = vdwg.mxu0
  %v1017 = vadd.f32 %v754, %v1014
  %v1018 = vxor.u32 %v1017, 2147483648
  %v1019 = vmul.f32 %v1018, 1.442695
  %v1020 = vpow.pop %v1019
  %v1021 = vadd.f32 %v1020, 1.0
  %v1022 = vrcp.pop %v1021
  %v1023 = vmul.f32 %v1021, %v1022
  %v1024 = vsub.f32 1.0, %v1023
  %v1025 = vmul.f32 %v1022, %v1024
  %v1026 = vadd.f32 %v1022, %v1025
  %vm1027 = vweird.f32 %v1021
  %vm1028 = vweird.f32 %v1022
  %vm1029 = vmor %vm1027, %vm1028
  %v1030 = vsel %vm1029, %v1022, %v1026
  %v1031 = vand.u32 2147483647, %v1021
  %vm1032 = vcmp.eq.f32.partialorder %v1031, 8.507059e+37
  %v1033 = vand.u32 %v1021, 2147483648
  %v1034 = vor.u32 1.1754944e-38, %v1033
  %v1035 = vsel %vm1032, %v1034, %v1030
  %v1036 = vmul.f32 1.0, %v1035
  %v1037 = vadd.f32 %v1014, %v827
  %1039 = vrot.lane.b32.xlu0 %v1037, 64
  %v1040 = vpop.permute.xlu0 %1039
  %v1042 = vmul.f32 %v1036, %v1040
  %1044 = vrot.lane.b32.xlu0 %v1042, 64
  %v1045 = vpop.permute.xlu0 %1044
  %v1047 = vadd.f32 %v754, %v1045
  %v1048 = vtanh.pop %v1047
  %v1049 = vsub.f32 %v991, %v1048
  %1051 = vrot.lane.b32.xlu0 %v1049, 96
  %v1052 = vpop.permute.xlu0 %1051
  %v1054 = vmul.f32 %v1036, %v1052
  %1056 = vrot.lane.b32.xlu0 %v1054, 32
  %v1057 = vpop.permute.xlu0 %1056
  %v1059 = vadd.f32 %v1048, %v1057
  %1061 = vrot.lane.b32.xlu0 %v1059, 64
  %v1062 = vpop.permute.xlu0 %1061
  %1064 = vst.msk [vmem:[#allocation2 + $0x18] sm:$0xff] %vm80, %v1062
  %v1065 = vpack.c.bf16 %v1059, %v1059
  %1067 = vrot.lane.b32.xlu0 %v1065, 64
  %v1068 = vpop.permute.xlu0 %1067
  %v1070 = vsel %vm80, %v1068, 0
  %1072 = vmatpush.bf16.msra.mxu0 0
  %1073 = vmatpush.bf16.msra.mxu0 0
  %1074 = vmatpush.bf16.msra.mxu0 0
  %1075 = vmatpush.bf16.msra.mxu0 0
  %1076 = vmatpush.bf16.msra.mxu0 0
  %1077 = vmatpush.bf16.msra.mxu0 0
  %1078 = vmatpush.bf16.msra.mxu0 %v785
  %1079 = vmatpush.bf16.msra.mxu0 %v784
  %1080 = vmatmul.bf16.gmra.mxu0 %v1070
  %v1081 = vpop.f32.mrf.mxu0
  %v1082 = vadd.f32 0.0, %v1081
  %v1083 = vpop.f32.mrf.mxu0
  %1084 = vdwg.mxu0
  %v1085 = vadd.f32 %v757, %v1082
  %v1086 = vxor.u32 %v1085, 2147483648
  %v1087 = vmul.f32 %v1086, 1.442695
  %v1088 = vpow.pop %v1087
  %v1089 = vadd.f32 %v1088, 1.0
  %v1090 = vrcp.pop %v1089
  %v1091 = vmul.f32 %v1089, %v1090
  %v1092 = vsub.f32 1.0, %v1091
  %v1093 = vmul.f32 %v1090, %v1092
  %v1094 = vadd.f32 %v1090, %v1093
  %vm1095 = vweird.f32 %v1089
  %vm1096 = vweird.f32 %v1090
  %vm1097 = vmor %vm1095, %vm1096
  %v1098 = vsel %vm1097, %v1090, %v1094
  %v1099 = vand.u32 2147483647, %v1089
  %vm1100 = vcmp.eq.f32.partialorder %v1099, 8.507059e+37
  %v1101 = vand.u32 %v1089, 2147483648
  %v1102 = vor.u32 1.1754944e-38, %v1101
  %v1103 = vsel %vm1100, %v1102, %v1098
  %v1104 = vmul.f32 1.0, %v1103
  %v1105 = vadd.f32 %v1082, %v827
  %1107 = vrot.lane.b32.xlu0 %v1105, 64
  %v1108 = vpop.permute.xlu0 %1107
  %v1110 = vmul.f32 %v1104, %v1108
  %1112 = vrot.lane.b32.xlu0 %v1110, 64
  %v1113 = vpop.permute.xlu0 %1112
  %v1115 = vadd.f32 %v757, %v1113
  %v1116 = vtanh.pop %v1115
  %v1117 = vsub.f32 %v1059, %v1116
  %1119 = vrot.lane.b32.xlu0 %v1117, 96
  %v1120 = vpop.permute.xlu0 %1119
  %v1122 = vmul.f32 %v1104, %v1120
  %1124 = vrot.lane.b32.xlu0 %v1122, 32
  %v1125 = vpop.permute.xlu0 %1124
  %v1127 = vadd.f32 %v1116, %v1125
  %1129 = vrot.lane.b32.xlu0 %v1127, 64
  %v1130 = vpop.permute.xlu0 %1129
  %1132 = vst.msk [vmem:[#allocation2 + $0x20] sm:$0xff] %vm80, %v1130
  %v1133 = vpack.c.bf16 %v1127, %v1127
  %1135 = vrot.lane.b32.xlu0 %v1133, 64
  %v1136 = vpop.permute.xlu0 %1135
  %v1138 = vsel %vm80, %v1136, 0
  %1140 = vmatpush.bf16.msra.mxu0 0
  %1141 = vmatpush.bf16.msra.mxu0 0
  %1142 = vmatpush.bf16.msra.mxu0 0
  %1143 = vmatpush.bf16.msra.mxu0 0
  %1144 = vmatpush.bf16.msra.mxu0 0
  %1145 = vmatpush.bf16.msra.mxu0 0
  %1146 = vmatpush.bf16.msra.mxu0 %v785
  %1147 = vmatpush.bf16.msra.mxu0 %v784
  %1148 = vmatmul.bf16.gmra.mxu0 %v1138
  %v1149 = vpop.f32.mrf.mxu0
  %v1150 = vadd.f32 0.0, %v1149
  %v1151 = vpop.f32.mrf.mxu0
  %1152 = vdwg.mxu0
  %v1153 = vadd.f32 %v759, %v1150
  %v1154 = vxor.u32 %v1153, 2147483648
  %v1155 = vmul.f32 %v1154, 1.442695
  %v1156 = vpow.pop %v1155
  %v1157 = vadd.f32 %v1156, 1.0
  %v1158 = vrcp.pop %v1157
  %v1159 = vmul.f32 %v1157, %v1158
  %v1160 = vsub.f32 1.0, %v1159
  %v1161 = vmul.f32 %v1158, %v1160
  %v1162 = vadd.f32 %v1158, %v1161
  %vm1163 = vweird.f32 %v1157
  %vm1164 = vweird.f32 %v1158
  %vm1165 = vmor %vm1163, %vm1164
  %v1166 = vsel %vm1165, %v1158, %v1162
  %v1167 = vand.u32 2147483647, %v1157
  %vm1168 = vcmp.eq.f32.partialorder %v1167, 8.507059e+37
  %v1169 = vand.u32 %v1157, 2147483648
  %v1170 = vor.u32 1.1754944e-38, %v1169
  %v1171 = vsel %vm1168, %v1170, %v1166
  %v1172 = vmul.f32 1.0, %v1171
  %v1173 = vadd.f32 %v1150, %v827
  %1175 = vrot.lane.b32.xlu0 %v1173, 64
  %v1176 = vpop.permute.xlu0 %1175
  %v1178 = vmul.f32 %v1172, %v1176
  %1180 = vrot.lane.b32.xlu0 %v1178, 64
  %v1181 = vpop.permute.xlu0 %1180
  %v1183 = vadd.f32 %v759, %v1181
  %v1184 = vtanh.pop %v1183
  %v1185 = vsub.f32 %v1127, %v1184
  %1187 = vrot.lane.b32.xlu0 %v1185, 96
  %v1188 = vpop.permute.xlu0 %1187
  %v1190 = vmul.f32 %v1172, %v1188
  %1192 = vrot.lane.b32.xlu0 %v1190, 32
  %v1193 = vpop.permute.xlu0 %1192
  %v1195 = vadd.f32 %v1184, %v1193
  %1197 = vrot.lane.b32.xlu0 %v1195, 64
  %v1198 = vpop.permute.xlu0 %1197
  %1200 = vst.msk [vmem:[#allocation2 + $0x28] sm:$0xff] %vm80, %v1198
  %v1201 = vpack.c.bf16 %v1195, %v1195
  %1203 = vrot.lane.b32.xlu0 %v1201, 64
  %v1204 = vpop.permute.xlu0 %1203
  %v1206 = vsel %vm80, %v1204, 0
  %1208 = vmatpush.bf16.msra.mxu0 0
  %1209 = vmatpush.bf16.msra.mxu0 0
  %1210 = vmatpush.bf16.msra.mxu0 0
  %1211 = vmatpush.bf16.msra.mxu0 0
  %1212 = vmatpush.bf16.msra.mxu0 0
  %1213 = vmatpush.bf16.msra.mxu0 0
  %1214 = vmatpush.bf16.msra.mxu0 %v785
  %1215 = vmatpush.bf16.msra.mxu0 %v784
  %1216 = vmatmul.bf16.gmra.mxu0 %v1206
  %v1217 = vpop.f32.mrf.mxu0
  %v1218 = vadd.f32 0.0, %v1217
  %v1219 = vpop.f32.mrf.mxu0
  %1220 = vdwg.mxu0
  %v1221 = vadd.f32 %v762, %v1218
  %v1222 = vxor.u32 %v1221, 2147483648
  %v1223 = vmul.f32 %v1222, 1.442695
  %v1224 = vpow.pop %v1223
  %v1225 = vadd.f32 %v1224, 1.0
  %v1226 = vrcp.pop %v1225
  %v1227 = vmul.f32 %v1225, %v1226
  %v1228 = vsub.f32 1.0, %v1227
  %v1229 = vmul.f32 %v1226, %v1228
  %v1230 = vadd.f32 %v1226, %v1229
  %vm1231 = vweird.f32 %v1225
  %vm1232 = vweird.f32 %v1226
  %vm1233 = vmor %vm1231, %vm1232
  %v1234 = vsel %vm1233, %v1226, %v1230
  %v1235 = vand.u32 2147483647, %v1225
  %vm1236 = vcmp.eq.f32.partialorder %v1235, 8.507059e+37
  %v1237 = vand.u32 %v1225, 2147483648
  %v1238 = vor.u32 1.1754944e-38, %v1237
  %v1239 = vsel %vm1236, %v1238, %v1234
  %v1240 = vmul.f32 1.0, %v1239
  %v1241 = vadd.f32 %v1218, %v827
  %1243 = vrot.lane.b32.xlu0 %v1241, 64
  %v1244 = vpop.permute.xlu0 %1243
  %v1246 = vmul.f32 %v1240, %v1244
  %1248 = vrot.lane.b32.xlu0 %v1246, 64
  %v1249 = vpop.permute.xlu0 %1248
  %v1251 = vadd.f32 %v762, %v1249
  %v1252 = vtanh.pop %v1251
  %v1253 = vsub.f32 %v1195, %v1252
  %1255 = vrot.lane.b32.xlu0 %v1253, 96
  %v1256 = vpop.permute.xlu0 %1255
  %v1258 = vmul.f32 %v1240, %v1256
  %1260 = vrot.lane.b32.xlu0 %v1258, 32
  %v1261 = vpop.permute.xlu0 %1260
  %v1263 = vadd.f32 %v1252, %v1261
  %1265 = vrot.lane.b32.xlu0 %v1263, 64
  %v1266 = vpop.permute.xlu0 %1265
  %1268 = vst.msk [vmem:[#allocation2 + $0x30] sm:$0xff] %vm80, %v1266
  %v1269 = vpack.c.bf16 %v1263, %v1263
  %1271 = vrot.lane.b32.xlu0 %v1269, 64
  %v1272 = vpop.permute.xlu0 %1271
  %v1274 = vsel %vm80, %v1272, 0
  %1276 = vmatpush.bf16.msra.mxu0 0
  %1277 = vmatpush.bf16.msra.mxu0 0
  %1278 = vmatpush.bf16.msra.mxu0 0
  %1279 = vmatpush.bf16.msra.mxu0 0
  %1280 = vmatpush.bf16.msra.mxu0 0
  %1281 = vmatpush.bf16.msra.mxu0 0
  %1282 = vmatpush.bf16.msra.mxu0 %v785
  %1283 = vmatpush.bf16.msra.mxu0 %v784
  %1284 = vmatmul.bf16.gmra.mxu0 %v1274
  %v1285 = vpop.f32.mrf.mxu0
  %v1286 = vadd.f32 0.0, %v1285
  %v1287 = vpop.f32.mrf.mxu0
  %1288 = vdwg.mxu0
  %v1289 = vadd.f32 %v764, %v1286
  %v1290 = vxor.u32 %v1289, 2147483648
  %v1291 = vmul.f32 %v1290, 1.442695
  %v1292 = vpow.pop %v1291
  %v1293 = vadd.f32 %v1292, 1.0
  %v1294 = vrcp.pop %v1293
  %v1295 = vmul.f32 %v1293, %v1294
  %v1296 = vsub.f32 1.0, %v1295
  %v1297 = vmul.f32 %v1294, %v1296
  %v1298 = vadd.f32 %v1294, %v1297
  %vm1299 = vweird.f32 %v1293
  %vm1300 = vweird.f32 %v1294
  %vm1301 = vmor %vm1299, %vm1300
  %v1302 = vsel %vm1301, %v1294, %v1298
  %v1303 = vand.u32 2147483647, %v1293
  %vm1304 = vcmp.eq.f32.partialorder %v1303, 8.507059e+37
  %v1305 = vand.u32 %v1293, 2147483648
  %v1306 = vor.u32 1.1754944e-38, %v1305
  %v1307 = vsel %vm1304, %v1306, %v1302
  %v1308 = vmul.f32 1.0, %v1307
  %v1309 = vadd.f32 %v1286, %v827
  %1311 = vrot.lane.b32.xlu0 %v1309, 64
  %v1312 = vpop.permute.xlu0 %1311
  %v1314 = vmul.f32 %v1308, %v1312
  %1316 = vrot.lane.b32.xlu0 %v1314, 64
  %v1317 = vpop.permute.xlu0 %1316
  %v1319 = vadd.f32 %v764, %v1317
  %v1320 = vtanh.pop %v1319
  %v1321 = vsub.f32 %v1263, %v1320
  %1323 = vrot.lane.b32.xlu0 %v1321, 96
  %v1324 = vpop.permute.xlu0 %1323
  %v1326 = vmul.f32 %v1308, %v1324
  %1328 = vrot.lane.b32.xlu0 %v1326, 32
  %v1329 = vpop.permute.xlu0 %1328
  %v1331 = vadd.f32 %v1320, %v1329
  %1333 = vrot.lane.b32.xlu0 %v1331, 64
  %v1334 = vpop.permute.xlu0 %1333
  %1336 = vst.msk [vmem:[#allocation2 + $0x38] sm:$0xff] %vm80, %v1334
  %s1337 = scalar_lea.vmem %s9, 8
  %1338 = vst.msk [vmem:[%s1337] sm:$0xff] %vm80, %v1334
  %v1339 = vld [vmem:[#allocation2] sm:$0xff]
  %v1340 = vld [vmem:[#allocation2 + $0x8] sm:$0xff]
  %v1341 = vld [vmem:[#allocation2 + $0x10] sm:$0xff]
  %v1342 = vld [vmem:[#allocation2 + $0x18] sm:$0xff]
  %v1343 = vld [vmem:[#allocation2 + $0x20] sm:$0xff]
  %v1344 = vld [vmem:[#allocation2 + $0x28] sm:$0xff]
  %v1345 = vld [vmem:[#allocation2 + $0x30] sm:$0xff]
  %v1346 = vld [vmem:[#allocation2 + $0x38] sm:$0xff]
  %v1347 = vpack.c.bf16 %v1340, %v1339
  %v1348 = vpack.c.bf16 %v1342, %v1341
  %v1349 = vpack.c.bf16 %v1344, %v1343
  %v1350 = vpack.c.bf16 %v1346, %v1345
  %v1351 = vld [vmem:[%s6] sm:$0xf]
  %v1352 = vld [vmem:[%s6 + $0x4] sm:$0xf]
  %v1353 = vld [vmem:[%s6 + $0x8] sm:$0xf]
  %v1354 = vld [vmem:[%s6 + $0xc] sm:$0xf]
  %v1355 = vld [vmem:[%s7] sm:$0x1]
  %v1357 = vperm.slane %v1355, 0
  %v1363 = vunpack.c.l.b16 %v1351
  %v1364 = vunpack.c.l.b16 %v1352
  %v1365 = vunpack.c.l.b16 %v1353
  %v1366 = vunpack.c.l.b16 %v1354
  %v1367 = vpack.c.b16 %v1364, %v1363
  %v1368 = vpack.c.b16 %v1366, %v1365
  %v1372 = vsel %vm80, %v1347, 0
  %v1375 = vsel %vm80, %v1348, 0
  %v1378 = vsel %vm80, %v1349, 0
  %v1381 = vsel %vm80, %v1350, 0
  %1383 = vmatpush.bf16.msra.mxu0 0
  %1384 = vmatpush.bf16.msra.mxu0 0
  %1385 = vmatpush.bf16.msra.mxu0 0
  %1386 = vmatpush.bf16.msra.mxu0 0
  %1387 = vmatpush.bf16.msra.mxu0 0
  %1388 = vmatpush.bf16.msra.mxu0 0
  %1389 = vmatpush.bf16.msra.mxu0 %v1368
  %1390 = vmatpush.bf16.msra.mxu0 %v1367
  %1391 = vmatmul.bf16.gmra.mxu0 %v1372
  %v1392 = vpop.f32.mrf.mxu0
  %v1393 = vadd.f32 %v1357, %v1392
  %v1394 = vpop.f32.mrf.mxu0
  %v1395 = vadd.f32 %v1357, %v1394
  %1396 = vmatmul.bf16.gmra.mxu0 %v1375
  %v1397 = vpop.f32.mrf.mxu0
  %v1398 = vadd.f32 %v1357, %v1397
  %v1399 = vpop.f32.mrf.mxu0
  %v1400 = vadd.f32 %v1357, %v1399
  %1401 = vmatmul.bf16.gmra.mxu0 %v1378
  %v1402 = vpop.f32.mrf.mxu0
  %v1403 = vadd.f32 %v1357, %v1402
  %v1404 = vpop.f32.mrf.mxu0
  %v1405 = vadd.f32 %v1357, %v1404
  %1406 = vmatmul.bf16.gmra.mxu0 %v1381
  %v1407 = vpop.f32.mrf.mxu0
  %v1408 = vadd.f32 %v1357, %v1407
  %v1409 = vpop.f32.mrf.mxu0
  %v1410 = vadd.f32 %v1357, %v1409
  %1411 = vdwg.mxu0
  %1412 = vmax.xlane.f32.xlu0 %v1393
  %v1413 = vpop.xlane.xlu0 %1412
  %1414 = vmax.xlane.f32.xlu0 %v1395
  %v1415 = vpop.xlane.xlu0 %1414
  %1416 = vmax.xlane.f32.xlu0 %v1398
  %v1417 = vpop.xlane.xlu0 %1416
  %1418 = vmax.xlane.f32.xlu0 %v1400
  %v1419 = vpop.xlane.xlu0 %1418
  %1420 = vmax.xlane.f32.xlu0 %v1403
  %v1421 = vpop.xlane.xlu0 %1420
  %1422 = vmax.xlane.f32.xlu0 %v1405
  %v1423 = vpop.xlane.xlu0 %1422
  %1424 = vmax.xlane.f32.xlu0 %v1408
  %v1425 = vpop.xlane.xlu0 %1424
  %1426 = vmax.xlane.f32.xlu0 %v1410
  %v1427 = vpop.xlane.xlu0 %1426
  %v1428 = vsub.f32 %v1393, %v1413
  %v1429 = vsub.f32 %v1395, %v1415
  %v1430 = vsub.f32 %v1398, %v1417
  %v1431 = vsub.f32 %v1400, %v1419
  %v1432 = vsub.f32 %v1403, %v1421
  %v1433 = vsub.f32 %v1405, %v1423
  %v1434 = vsub.f32 %v1408, %v1425
  %v1435 = vsub.f32 %v1410, %v1427
  %v1436 = vmul.f32 %v1428, 1.442695
  %v1437 = vpow.pop %v1436
  %v1438 = vmul.f32 %v1429, 1.442695
  %v1439 = vpow.pop %v1438
  %v1440 = vmul.f32 %v1430, 1.442695
  %v1441 = vpow.pop %v1440
  %v1442 = vmul.f32 %v1431, 1.442695
  %v1443 = vpow.pop %v1442
  %v1444 = vmul.f32 %v1432, 1.442695
  %v1445 = vpow.pop %v1444
  %v1446 = vmul.f32 %v1433, 1.442695
  %v1447 = vpow.pop %v1446
  %v1448 = vmul.f32 %v1434, 1.442695
  %v1449 = vpow.pop %v1448
  %v1450 = vmul.f32 %v1435, 1.442695
  %v1451 = vpow.pop %v1450
  %1452 = vadd.xlane.f32.xlu0 %v1437
  %v1453 = vpop.xlane.xlu0 %1452
  %1454 = vadd.xlane.f32.xlu0 %v1439
  %v1455 = vpop.xlane.xlu0 %1454
  %1456 = vadd.xlane.f32.xlu0 %v1441
  %v1457 = vpop.xlane.xlu0 %1456
  %1458 = vadd.xlane.f32.xlu0 %v1443
  %v1459 = vpop.xlane.xlu0 %1458
  %1460 = vadd.xlane.f32.xlu0 %v1445
  %v1461 = vpop.xlane.xlu0 %1460
  %1462 = vadd.xlane.f32.xlu0 %v1447
  %v1463 = vpop.xlane.xlu0 %1462
  %1464 = vadd.xlane.f32.xlu0 %v1449
  %v1465 = vpop.xlane.xlu0 %1464
  %1466 = vadd.xlane.f32.xlu0 %v1451
  %v1467 = vpop.xlane.xlu0 %1466
  %v1468 = vlog2.pop %v1453
  %v1469 = vmul.f32 %v1468, 0.6931472
  %v1470 = vlog2.pop %v1455
  %v1471 = vmul.f32 %v1470, 0.6931472
  %v1472 = vlog2.pop %v1457
  %v1473 = vmul.f32 %v1472, 0.6931472
  %v1474 = vlog2.pop %v1459
  %v1475 = vmul.f32 %v1474, 0.6931472
  %v1476 = vlog2.pop %v1461
  %v1477 = vmul.f32 %v1476, 0.6931472
  %v1478 = vlog2.pop %v1463
  %v1479 = vmul.f32 %v1478, 0.6931472
  %v1480 = vlog2.pop %v1465
  %v1481 = vmul.f32 %v1480, 0.6931472
  %v1482 = vlog2.pop %v1467
  %v1483 = vmul.f32 %v1482, 0.6931472
  %v1484 = vsub.f32 %v1428, %v1469
  %v1485 = vsub.f32 %v1429, %v1471
  %v1486 = vsub.f32 %v1430, %v1473
  %v1487 = vsub.f32 %v1431, %v1475
  %v1488 = vsub.f32 %v1432, %v1477
  %v1489 = vsub.f32 %v1433, %v1479
  %v1490 = vsub.f32 %v1434, %v1481
  %v1491 = vsub.f32 %v1435, %v1483
  %1492 = vst [vmem:[%s8] sm:$0xff] %v1484
  %1493 = vst [vmem:[%s8 + $0x8] sm:$0xff] %v1485
  %1494 = vst [vmem:[%s8 + $0x10] sm:$0xff] %v1486
  %1495 = vst [vmem:[%s8 + $0x18] sm:$0xff] %v1487
  %1496 = vst [vmem:[%s8 + $0x20] sm:$0xff] %v1488
  %1497 = vst [vmem:[%s8 + $0x28] sm:$0xff] %v1489
  %1498 = vst [vmem:[%s8 + $0x30] sm:$0xff] %v1490
  %1499 = vst [vmem:[%s8 + $0x38] sm:$0xff] %v1491
  // Predicated region
  $region34: #{char_rnn_forward.1} parent=0 // pred_check
    _
  $region35: #{char_rnn_forward.1} parent=0 // pred_check_branch
    %1501 = sbr.rel (0) target = $region37
  $region36: #{char_rnn_forward.1} parent=0 // pred_region
    _
  $region37: #{char_rnn_forward.1} parent=0 // pred_fallthru
    _
  // Predicated region
  $region38: #{char_rnn_forward.1} parent=0 // pred_check
    _
  $region39: #{char_rnn_forward.1} parent=0 // pred_check_branch
    %1503 = sbr.rel (0) target = $region41
  $region40: #{char_rnn_forward.1} parent=0 // pred_region
    _
  $region41: #{char_rnn_forward.1} parent=0 // pred_fallthru
    _
  // Predicated region
  $region42: #{char_rnn_forward.1} parent=0 // pred_check
    _
  $region43: #{char_rnn_forward.1} parent=0 // pred_check_branch
    %1505 = sbr.rel (0) target = $region45
  $region44: #{char_rnn_forward.1} parent=0 // pred_region
    _
  $region45: #{char_rnn_forward.1} parent=0 // pred_fallthru
    _
  // Predicated region
  $region46: #{char_rnn_forward.1} parent=0 // pred_check
    _
  $region47: #{char_rnn_forward.1} parent=0 // pred_check_branch
    %1507 = sbr.rel (0) target = $region49
  $region48: #{char_rnn_forward.1} parent=0 // pred_region
    _
  $region49: #{char_rnn_forward.1} parent=0 // pred_fallthru
    _

</llo_original>
